<compile_context>
chip_gen: v6e
topology: v6e:2x2x1
jax: 0.10.0
libtpu: 0.0.40
codegen_flags: <defaults>
</compile_context>

<pallas_src>
import jax
import jax.numpy as jnp
from jax.experimental import pallas as pl
from jax.experimental.pallas import tpu as pltpu

INPUT_DIM = 784
HIDDEN_DIM1 = 500
HIDDEN_DIM2 = 300
HIDDEN_DIM3 = 100
OUTPUT_DIM = 10


def _round_up(n, m):
    return ((n + m - 1) // m) * m


# Hidden/output dims lane-padded to multiples of 128 (input dim left at 784).
PAD_H1 = _round_up(HIDDEN_DIM1, 128)    # 512
PAD_H2 = _round_up(HIDDEN_DIM2, 128)    # 384
PAD_H3 = _round_up(HIDDEN_DIM3, 128)    # 128
PAD_OUT = _round_up(OUTPUT_DIM, 128)    # 128


def _mlp_kernel(x_ref, w1_ref, b1_ref, w2_ref, b2_ref, w3_ref, b3_ref,
                w4_ref, b4_ref, o_ref):
    # fc1 + ReLU (bf16 operands, f32 accumulation; bias-add/ReLU in f32)
    h = jnp.dot(x_ref[...], w1_ref[...], preferred_element_type=jnp.float32)
    h = jnp.maximum(h + b1_ref[...], 0.0)
    # fc2 + ReLU
    h = jnp.dot(h.astype(jnp.bfloat16), w2_ref[...],
                preferred_element_type=jnp.float32)
    h = jnp.maximum(h + b2_ref[...], 0.0)
    # fc3 + ReLU
    h = jnp.dot(h.astype(jnp.bfloat16), w3_ref[...],
                preferred_element_type=jnp.float32)
    h = jnp.maximum(h + b3_ref[...], 0.0)
    # fc5 (no activation)
    out = jnp.dot(h.astype(jnp.bfloat16), w4_ref[...],
                  preferred_element_type=jnp.float32)
    o_ref[...] = out + b4_ref[...]


def _pick_batch_tile(batch):
    if batch <= 256:
        # Single tile; round to 16 for full bf16 (16,128) sublane packing.
        return _round_up(batch, 16)
    # Large batch: big tile to amortize per-grid-step overhead, but keep the
    # grid >= 2 steps so v7x megacore can shard the "parallel" batch axis.
    tb = 512
    if _round_up(batch, tb) // tb < 2:
        tb = 256
    return tb


@jax.jit
def neural_network_forward(x, prepared):
    """x: (batch, 784) f32.  prepared: padded/bf16 params from prepare_params."""
    batch = x.shape[0]
    tb = _pick_batch_tile(batch)
    padded_batch = _round_up(batch, tb)

    # Cast only (no feature-padded HBM copy); batch-pad with zeros if needed.
    x_bf = x.astype(jnp.bfloat16)
    if padded_batch != batch:
        x_bf = jnp.pad(x_bf, ((0, padded_batch - batch), (0, 0)))

    grid = (padded_batch // tb,)

    # Weights / biases: constant index_map -> DMA'd once, resident across steps.
    def const_spec(shape):
        return pl.BlockSpec(shape, lambda i: (0, 0))

    out_p = pl.pallas_call(
        _mlp_kernel,
        out_shape=jax.ShapeDtypeStruct((padded_batch, PAD_OUT), jnp.float32),
        grid=grid,
        in_specs=[
            pl.BlockSpec((tb, INPUT_DIM), lambda i: (i, 0)),  # x tile (pipelined)
            const_spec((INPUT_DIM, PAD_H1)), const_spec((1, PAD_H1)),
            const_spec((PAD_H1, PAD_H2)), const_spec((1, PAD_H2)),
            const_spec((PAD_H2, PAD_H3)), const_spec((1, PAD_H3)),
            const_spec((PAD_H3, PAD_OUT)), const_spec((1, PAD_OUT)),
        ],
        out_specs=pl.BlockSpec((tb, PAD_OUT), lambda i: (i, 0)),
        compiler_params=pltpu.CompilerParams(
            dimension_semantics=("parallel",)),
    )(x_bf,
      prepared["w1"], prepared["b1"],
      prepared["w2"], prepared["b2"],
      prepared["w3"], prepared["b3"],
      prepared["w4"], prepared["b4"])

    return out_p[:batch, :OUTPUT_DIM]


def init_params(key):
    """PyTorch-style init U(-1/sqrt(fan_in), 1/sqrt(fan_in)); weights (in,out)."""
    dims = [(INPUT_DIM, HIDDEN_DIM1),
            (HIDDEN_DIM1, HIDDEN_DIM2),
            (HIDDEN_DIM2, HIDDEN_DIM3),
            (HIDDEN_DIM3, OUTPUT_DIM)]
    params = {}
    for i, (fan_in, fan_out) in enumerate(dims, start=1):
        key, kw, kb = jax.random.split(key, 3)
        bound = 1.0 / jnp.sqrt(jnp.float32(fan_in))
        params[f"w{i}"] = jax.random.uniform(
            kw, (fan_in, fan_out), jnp.float32, -bound, bound)
        params[f"b{i}"] = jax.random.uniform(
            kb, (1, fan_out), jnp.float32, -bound, bound)
    return params


def prepare_params(params):
    """Pad hidden/output dims to multiples of 128; weights -> bf16, biases -> f32.

    The input dim (784) is intentionally left unpadded.
    """
    pads = {1: (INPUT_DIM, PAD_H1), 2: (PAD_H1, PAD_H2),
            3: (PAD_H2, PAD_H3), 4: (PAD_H3, PAD_OUT)}
    prepared = {}
    for i, (pin, pout) in pads.items():
        w = params[f"w{i}"]
        b = params[f"b{i}"]
        w_p = jnp.zeros((pin, pout), jnp.bfloat16)
        w_p = w_p.at[:w.shape[0], :w.shape[1]].set(w.astype(jnp.bfloat16))
        b_p = jnp.zeros((1, pout), jnp.float32)
        b_p = b_p.at[:, :b.shape[1]].set(b)
        prepared[f"w{i}"] = w_p
        prepared[f"b{i}"] = b_p
    return prepared


def reference_forward(x, params):
    """Reference with the same bf16-operand / f32-accumulate semantics."""
    def lin(h, w, b):
        return jnp.dot(h.astype(jnp.bfloat16), w.astype(jnp.bfloat16),
                       preferred_element_type=jnp.float32) + b
    h = jnp.maximum(lin(x, params["w1"], params["b1"]), 0.0)
    h = jnp.maximum(lin(h, params["w2"], params["b2"]), 0.0)
    h = jnp.maximum(lin(h, params["w3"], params["b3"]), 0.0)
    return lin(h, params["w4"], params["b4"])


if __name__ == "__main__":
    key = jax.random.PRNGKey(0)
    key, kx = jax.random.split(key)

    batch = 8
    x = jax.random.normal(kx, (batch, INPUT_DIM), dtype=jnp.float32)
    params = init_params(key)
    prepared = prepare_params(params)

    out = neural_network_forward(x, prepared)
    out = jax.block_until_ready(out)

    ref = reference_forward(x, params)
    assert out.shape == (batch, OUTPUT_DIM)
    assert jnp.allclose(out, ref, atol=2e-2, rtol=2e-2)

    print("KERNEL_OK")
</pallas_src>

<mosaic_0001>
module attributes {stable_mosaic.version = 11 : i64} {
  func.func @_mlp_kernel(%arg0: i32, %arg1: memref<16x784xbf16, #tpu.memory_space<vmem>>, %arg2: memref<784x512xbf16, #tpu.memory_space<vmem>>, %arg3: memref<1x512xf32, #tpu.memory_space<vmem>>, %arg4: memref<512x384xbf16, #tpu.memory_space<vmem>>, %arg5: memref<1x384xf32, #tpu.memory_space<vmem>>, %arg6: memref<384x128xbf16, #tpu.memory_space<vmem>>, %arg7: memref<1x128xf32, #tpu.memory_space<vmem>>, %arg8: memref<128x128xbf16, #tpu.memory_space<vmem>>, %arg9: memref<1x128xf32, #tpu.memory_space<vmem>>, %arg10: memref<16x128xf32, #tpu.memory_space<vmem>>) attributes {dimension_semantics = [#tpu.dimension_semantics<parallel>], iteration_bounds = array<i64: 1>, scalar_prefetch = 0 : i64, scratch_operands = 0 : i64, tpu.core_type = #tpu.core_type<tc>, window_params = [{transform_indices = @transform_0, window_bounds = array<i64: 16, 784>}, {pipeline_mode = #tpu.pipeline_mode<synchronous>, transform_indices = @transform_1, window_bounds = array<i64: 784, 512>}, {pipeline_mode = #tpu.pipeline_mode<synchronous>, transform_indices = @transform_2, window_bounds = array<i64: 1, 512>}, {pipeline_mode = #tpu.pipeline_mode<synchronous>, transform_indices = @transform_3, window_bounds = array<i64: 512, 384>}, {pipeline_mode = #tpu.pipeline_mode<synchronous>, transform_indices = @transform_4, window_bounds = array<i64: 1, 384>}, {pipeline_mode = #tpu.pipeline_mode<synchronous>, transform_indices = @transform_5, window_bounds = array<i64: 384, 128>}, {pipeline_mode = #tpu.pipeline_mode<synchronous>, transform_indices = @transform_6, window_bounds = array<i64: 1, 128>}, {pipeline_mode = #tpu.pipeline_mode<synchronous>, transform_indices = @transform_7, window_bounds = array<i64: 128, 128>}, {pipeline_mode = #tpu.pipeline_mode<synchronous>, transform_indices = @transform_8, window_bounds = array<i64: 1, 128>}, {transform_indices = @transform_9, window_bounds = array<i64: 16, 128>}]} {
    %c0 = arith.constant 0 : index
    %c0_0 = arith.constant 0 : index
    %0 = vector.load %arg1[%c0, %c0_0] : memref<16x784xbf16, #tpu.memory_space<vmem>>, vector<16x784xbf16>
    %c0_1 = arith.constant 0 : index
    %c0_2 = arith.constant 0 : index
    %1 = vector.load %arg2[%c0_1, %c0_2] : memref<784x512xbf16, #tpu.memory_space<vmem>>, vector<784x512xbf16>
    %cst = arith.constant dense<0.000000e+00> : vector<16x512xf32>
    %2 = tpu.matmul %0, %1, %cst {dimension_numbers = #tpu.dot_dimension_numbers<[1], [0], [0], [1], [0, 0, 1, 1], [], []>} : vector<16x784xbf16>, vector<784x512xbf16>, vector<16x512xf32> -> vector<16x512xf32>
    %c0_3 = arith.constant 0 : index
    %c0_4 = arith.constant 0 : index
    %3 = vector.load %arg3[%c0_3, %c0_4] : memref<1x512xf32, #tpu.memory_space<vmem>>, vector<1x512xf32>
    %4 = vector.broadcast %3 : vector<1x512xf32> to vector<16x512xf32>
    %5 = arith.addf %2, %4 : vector<16x512xf32>
    %cst_5 = arith.constant 0.000000e+00 : f32
    %6 = vector.broadcast %cst_5 : f32 to vector<16x512xf32>
    %7 = arith.maximumf %5, %6 : vector<16x512xf32>
    %8 = arith.truncf %7 : vector<16x512xf32> to vector<16x512xbf16>
    %c0_6 = arith.constant 0 : index
    %c0_7 = arith.constant 0 : index
    %9 = vector.load %arg4[%c0_6, %c0_7] : memref<512x384xbf16, #tpu.memory_space<vmem>>, vector<512x384xbf16>
    %cst_8 = arith.constant dense<0.000000e+00> : vector<16x384xf32>
    %10 = tpu.matmul %8, %9, %cst_8 {dimension_numbers = #tpu.dot_dimension_numbers<[1], [0], [0], [1], [0, 0, 1, 1], [], []>} : vector<16x512xbf16>, vector<512x384xbf16>, vector<16x384xf32> -> vector<16x384xf32>
    %c0_9 = arith.constant 0 : index
    %c0_10 = arith.constant 0 : index
    %11 = vector.load %arg5[%c0_9, %c0_10] : memref<1x384xf32, #tpu.memory_space<vmem>>, vector<1x384xf32>
    %12 = vector.broadcast %11 : vector<1x384xf32> to vector<16x384xf32>
    %13 = arith.addf %10, %12 : vector<16x384xf32>
    %cst_11 = arith.constant 0.000000e+00 : f32
    %14 = vector.broadcast %cst_11 : f32 to vector<16x384xf32>
    %15 = arith.maximumf %13, %14 : vector<16x384xf32>
    %16 = arith.truncf %15 : vector<16x384xf32> to vector<16x384xbf16>
    %c0_12 = arith.constant 0 : index
    %c0_13 = arith.constant 0 : index
    %17 = vector.load %arg6[%c0_12, %c0_13] : memref<384x128xbf16, #tpu.memory_space<vmem>>, vector<384x128xbf16>
    %cst_14 = arith.constant dense<0.000000e+00> : vector<16x128xf32>
    %18 = tpu.matmul %16, %17, %cst_14 {dimension_numbers = #tpu.dot_dimension_numbers<[1], [0], [0], [1], [0, 0, 1, 1], [], []>} : vector<16x384xbf16>, vector<384x128xbf16>, vector<16x128xf32> -> vector<16x128xf32>
    %c0_15 = arith.constant 0 : index
    %c0_16 = arith.constant 0 : index
    %19 = vector.load %arg7[%c0_15, %c0_16] : memref<1x128xf32, #tpu.memory_space<vmem>>, vector<1x128xf32>
    %20 = vector.broadcast %19 : vector<1x128xf32> to vector<16x128xf32>
    %21 = arith.addf %18, %20 : vector<16x128xf32>
    %cst_17 = arith.constant 0.000000e+00 : f32
    %22 = vector.broadcast %cst_17 : f32 to vector<16x128xf32>
    %23 = arith.maximumf %21, %22 : vector<16x128xf32>
    %24 = arith.truncf %23 : vector<16x128xf32> to vector<16x128xbf16>
    %c0_18 = arith.constant 0 : index
    %c0_19 = arith.constant 0 : index
    %25 = vector.load %arg8[%c0_18, %c0_19] : memref<128x128xbf16, #tpu.memory_space<vmem>>, vector<128x128xbf16>
    %cst_20 = arith.constant dense<0.000000e+00> : vector<16x128xf32>
    %26 = tpu.matmul %24, %25, %cst_20 {dimension_numbers = #tpu.dot_dimension_numbers<[1], [0], [0], [1], [0, 0, 1, 1], [], []>} : vector<16x128xbf16>, vector<128x128xbf16>, vector<16x128xf32> -> vector<16x128xf32>
    %c0_21 = arith.constant 0 : index
    %c0_22 = arith.constant 0 : index
    %27 = vector.load %arg9[%c0_21, %c0_22] : memref<1x128xf32, #tpu.memory_space<vmem>>, vector<1x128xf32>
    %28 = vector.broadcast %27 : vector<1x128xf32> to vector<16x128xf32>
    %29 = arith.addf %26, %28 : vector<16x128xf32>
    %c0_23 = arith.constant 0 : index
    %c0_24 = arith.constant 0 : index
    %30 = vector.load %arg10[%c0_23, %c0_24] : memref<16x128xf32, #tpu.memory_space<vmem>>, vector<16x128xf32>
    tpu.vector_store %arg10[%c0_23, %c0_24], %29 {strides = array<i32>} : memref<16x128xf32, #tpu.memory_space<vmem>>, vector<16x128xf32>,
    return
  }
  func.func @transform_0(%arg0: i32) -> (i32, i32) {
    %c0_i32 = arith.constant 0 : i32
    %c0_i32_0 = arith.constant 0 : i32
    return %arg0, %c0_i32 : i32, i32
  }
  func.func @transform_1(%arg0: i32) -> (i32, i32) {
    %c0_i32 = arith.constant 0 : i32
    %c0_i32_0 = arith.constant 0 : i32
    %c0_i32_1 = arith.constant 0 : i32
    return %c0_i32, %c0_i32_0 : i32, i32
  }
  func.func @transform_2(%arg0: i32) -> (i32, i32) {
    %c0_i32 = arith.constant 0 : i32
    %c0_i32_0 = arith.constant 0 : i32
    %c0_i32_1 = arith.constant 0 : i32
    return %c0_i32, %c0_i32_0 : i32, i32
  }
  func.func @transform_3(%arg0: i32) -> (i32, i32) {
    %c0_i32 = arith.constant 0 : i32
    %c0_i32_0 = arith.constant 0 : i32
    %c0_i32_1 = arith.constant 0 : i32
    return %c0_i32, %c0_i32_0 : i32, i32
  }
  func.func @transform_4(%arg0: i32) -> (i32, i32) {
    %c0_i32 = arith.constant 0 : i32
    %c0_i32_0 = arith.constant 0 : i32
    %c0_i32_1 = arith.constant 0 : i32
    return %c0_i32, %c0_i32_0 : i32, i32
  }
  func.func @transform_5(%arg0: i32) -> (i32, i32) {
    %c0_i32 = arith.constant 0 : i32
    %c0_i32_0 = arith.constant 0 : i32
    %c0_i32_1 = arith.constant 0 : i32
    return %c0_i32, %c0_i32_0 : i32, i32
  }
  func.func @transform_6(%arg0: i32) -> (i32, i32) {
    %c0_i32 = arith.constant 0 : i32
    %c0_i32_0 = arith.constant 0 : i32
    %c0_i32_1 = arith.constant 0 : i32
    return %c0_i32, %c0_i32_0 : i32, i32
  }
  func.func @transform_7(%arg0: i32) -> (i32, i32) {
    %c0_i32 = arith.constant 0 : i32
    %c0_i32_0 = arith.constant 0 : i32
    %c0_i32_1 = arith.constant 0 : i32
    return %c0_i32, %c0_i32_0 : i32, i32
  }
  func.func @transform_8(%arg0: i32) -> (i32, i32) {
    %c0_i32 = arith.constant 0 : i32
    %c0_i32_0 = arith.constant 0 : i32
    %c0_i32_1 = arith.constant 0 : i32
    return %c0_i32, %c0_i32_0 : i32, i32
  }
  func.func @transform_9(%arg0: i32) -> (i32, i32) {
    %c0_i32 = arith.constant 0 : i32
    %c0_i32_0 = arith.constant 0 : i32
    return %arg0, %c0_i32 : i32, i32
  }
}

</mosaic_0001>

<llo_original>
// kernel: neural_network_forward.1
$region0: #{neural_network_forward.1}
  #allocation0 [shape = 'u32[]', space=smem, size = 0x4, offset = 0x4, fixed_abs, tag = 'smem constant byte address 0x4 - core index']
  #allocation1 [shape = 'u32[144,128]{1,0:T(1,128)}', space=vmem, size = 0x12000, scoped, tag = 'internal scratch']
  %s0 = inlined_call_operand.vmem [shape: bf16[16,784], index: 0, kind: input, shape index: {}]
  %s1 = inlined_call_operand.hbm [shape: bf16[784,512], index: 1, kind: input, shape index: {}]
  %s2 = inlined_call_operand.vmem [shape: f32[1,512], index: 2, kind: input, shape index: {}]
  %s3 = inlined_call_operand.hbm [shape: bf16[512,384], index: 3, kind: input, shape index: {}]
  %s4 = inlined_call_operand.vmem [shape: f32[1,384], index: 4, kind: input, shape index: {}]
  %s5 = inlined_call_operand.hbm [shape: bf16[384,128], index: 5, kind: input, shape index: {}]
  %s6 = inlined_call_operand.vmem [shape: f32[1,128], index: 6, kind: input, shape index: {}]
  %s7 = inlined_call_operand.vmem [shape: bf16[128,128], index: 7, kind: input, shape index: {}]
  %s8 = inlined_call_operand.vmem [shape: f32[1,128], index: 8, kind: input, shape index: {}]
  %s9 = inlined_call_operand.vmem [shape: f32[16,128], index: 9, kind: output, shape index: {}]
  %s10 = sld [smem:[#allocation0]]
  $region58: #{neural_network_forward.1} parent=0
    _
  %s12 = ssub.s32 1, %s10
  %s13 = scalar_select 0, %s12, %s10
  $region1: #{neural_network_forward.1} parent=0
    #allocation2 [shape = 'u8[802816]{0}', space=vmem, size = 0xc4000, scoped, tag = 'input window, operand 1, single buffered']
    #allocation3 [shape = 's32[1]{0}', space=sflag, size = 0x4, scoped, tag = 'scoped memory for neural_network_forward.1']
    #allocation4 [shape = 'u8[393216]{0}', space=vmem, size = 0x60000, scoped, tag = 'input window, operand 3, single buffered']
    #allocation5 [shape = 's32[1]{0}', space=sflag, size = 0x4, scoped, tag = 'scoped memory for neural_network_forward.1']
    #allocation6 [shape = 'u8[98304]{0}', space=vmem, size = 0x18000, scoped, tag = 'input window, operand 5, single buffered']
    %14 = vsyncpa [#allocation3], 0
    %15 = vsyncpa [#allocation5], 0
    // Predicated region
    $region2: #{neural_network_forward.1} parent=1 // pred_check
      _
    $region3: #{neural_network_forward.1} parent=1 // pred_check_branch
      %17 = sbr.rel (0) target = $region5
    $region4: #{neural_network_forward.1} parent=1 // pred_region
      _
    $region5: #{neural_network_forward.1} parent=1 // pred_fallthru
      _
    // Predicated region
    $region6: #{neural_network_forward.1} parent=1 // pred_check
      _
    $region7: #{neural_network_forward.1} parent=1 // pred_check_branch
      %19 = sbr.rel (0) target = $region9
    $region8: #{neural_network_forward.1} parent=1 // pred_region
      %s21 = ssub.s32 25088, 25088
      %22 = vsyncadd [#allocation3], %s21
      %s23 = sshll.u32 [#allocation2], 4
      %s24 = int_to_ptr.vmem [resolvable:$true] %s23
      %29 = dma.hbm_to_vmem [thread:$0]  %s1, 25088, %s24, [#allocation3], 256, 256, 16
    $region9: #{neural_network_forward.1} parent=1 // pred_fallthru
      _
    // Predicated region
    $region10: #{neural_network_forward.1} parent=1 // pred_check
      _
    $region11: #{neural_network_forward.1} parent=1 // pred_check_branch
      %31 = sbr.rel (0) target = $region13
    $region12: #{neural_network_forward.1} parent=1 // pred_region
      _
    $region13: #{neural_network_forward.1} parent=1 // pred_fallthru
      _
    // Predicated region
    $region14: #{neural_network_forward.1} parent=1 // pred_check
      _
    $region15: #{neural_network_forward.1} parent=1 // pred_check_branch
      %33 = sbr.rel (0) target = $region17
    $region16: #{neural_network_forward.1} parent=1 // pred_region
      %s35 = ssub.s32 12288, 12288
      %36 = vsyncadd [#allocation5], %s35
      %s37 = sshll.u32 [#allocation4], 4
      %s38 = int_to_ptr.vmem [resolvable:$true] %s37
      %43 = dma.hbm_to_vmem [thread:$0]  %s3, 12288, %s38, [#allocation5], 192, 192, 12
    $region17: #{neural_network_forward.1} parent=1 // pred_fallthru
      _
    // Predicated region
    $region18: #{neural_network_forward.1} parent=1 // pred_check
      _
    $region19: #{neural_network_forward.1} parent=1 // pred_check_branch
      %45 = sbr.rel (0) target = $region21
    $region20: #{neural_network_forward.1} parent=1 // pred_region
      _
    $region21: #{neural_network_forward.1} parent=1 // pred_fallthru
      _
    // Predicated region
    $region22: #{neural_network_forward.1} parent=1 // pred_check
      _
    $region23: #{neural_network_forward.1} parent=1 // pred_check_branch
      %47 = sbr.rel (0) target = $region25
    $region24: #{neural_network_forward.1} parent=1 // pred_region
      %s49 = ssub.s32 3072, 3072
      %50 = vsyncadd [#allocation5], %s49
      %s51 = sshll.u32 [#allocation6], 4
      %s52 = int_to_ptr.vmem [resolvable:$true] %s51
      %57 = dma.hbm_to_vmem [thread:$0]  %s5, 3072, %s52, [#allocation5], 64, 64, 4
    $region25: #{neural_network_forward.1} parent=1 // pred_fallthru
      _
    // Predicated region
    $region26: #{neural_network_forward.1} parent=1 // pred_check
      _
    $region27: #{neural_network_forward.1} parent=1 // pred_check_branch
      %59 = sbr.rel (0) target = $region29
    $region28: #{neural_network_forward.1} parent=1 // pred_region
      _
    $region29: #{neural_network_forward.1} parent=1 // pred_fallthru
      _
    // Predicated region
    $region30: #{neural_network_forward.1} parent=1 // pred_check
      _
    $region31: #{neural_network_forward.1} parent=1 // pred_check_branch
      %61 = sbr.rel (0) target = $region33
    $region32: #{neural_network_forward.1} parent=1 // pred_region
      _
    $region33: #{neural_network_forward.1} parent=1 // pred_fallthru
      _
    // Predicated region
    $region34: #{neural_network_forward.1} parent=1 // pred_check
      _
    $region35: #{neural_network_forward.1} parent=1 // pred_check_branch
      %63 = sbr.rel (0) target = $region37
    $region36: #{neural_network_forward.1} parent=1 // pred_region
      _
    $region37: #{neural_network_forward.1} parent=1 // pred_fallthru
      _
    // Predicated region
    $region38: #{neural_network_forward.1} parent=1 // pred_check
      _
    $region39: #{neural_network_forward.1} parent=1 // pred_check_branch
      %65 = sbr.rel (0) target = $region41
    $region40: #{neural_network_forward.1} parent=1 // pred_region
      %66 = dma.done [#allocation3], 25088
    $region41: #{neural_network_forward.1} parent=1 // pred_fallthru
      _
    // Predicated region
    $region42: #{neural_network_forward.1} parent=1 // pred_check
      _
    $region43: #{neural_network_forward.1} parent=1 // pred_check_branch
      %68 = sbr.rel (0) target = $region45
    $region44: #{neural_network_forward.1} parent=1 // pred_region
      %69 = dma.done [#allocation5], 12288
    $region45: #{neural_network_forward.1} parent=1 // pred_fallthru
      _
    // Predicated region
    $region46: #{neural_network_forward.1} parent=1 // pred_check
      _
    $region47: #{neural_network_forward.1} parent=1 // pred_check_branch
      %71 = sbr.rel (0) target = $region49
    $region48: #{neural_network_forward.1} parent=1 // pred_region
      %72 = dma.done [#allocation5], 3072
    $region49: #{neural_network_forward.1} parent=1 // pred_fallthru
      _
    %v74 = vld [vmem:[%s0] sm:$0xff]
    %v75 = vld [vmem:[%s0 + $0x8] sm:$0xff]
    %v76 = vld [vmem:[%s0 + $0x10] sm:$0xff]
    %v77 = vld [vmem:[%s0 + $0x18] sm:$0xf]
    %v78 = vld [vmem:[%s0 + $0x1c] sm:$0xff]
    %v79 = vld [vmem:[%s0 + $0x24] sm:$0xff]
    %v80 = vld [vmem:[%s0 + $0x2c] sm:$0xff]
    %v81 = vld [vmem:[%s0 + $0x34] sm:$0xf]
    %v82 = vld [vmem:[#allocation2] sm:$0xff]
    %v83 = vld [vmem:[#allocation2 + $0x8] sm:$0xff]
    %v84 = vld [vmem:[#allocation2 + $0x10] sm:$0xff]
    %v85 = vld [vmem:[#allocation2 + $0x18] sm:$0xff]
    %v86 = vld [vmem:[#allocation2 + $0x20] sm:$0xff]
    %v87 = vld [vmem:[#allocation2 + $0x28] sm:$0xff]
    %v88 = vld [vmem:[#allocation2 + $0x30] sm:$0xff]
    %v89 = vld [vmem:[#allocation2 + $0x38] sm:$0xff]
    %v90 = vld [vmem:[#allocation2 + $0x40] sm:$0xff]
    %v91 = vld [vmem:[#allocation2 + $0x48] sm:$0xff]
    %v92 = vld [vmem:[#allocation2 + $0x50] sm:$0xff]
    %v93 = vld [vmem:[#allocation2 + $0x58] sm:$0xff]
    %v94 = vld [vmem:[#allocation2 + $0x60] sm:$0xff]
    %v95 = vld [vmem:[#allocation2 + $0x68] sm:$0xff]
    %v96 = vld [vmem:[#allocation2 + $0x70] sm:$0xff]
    %v97 = vld [vmem:[#allocation2 + $0x78] sm:$0xff]
    %v98 = vld [vmem:[#allocation2 + $0x80] sm:$0xff]
    %v99 = vld [vmem:[#allocation2 + $0x88] sm:$0xff]
    %v100 = vld [vmem:[#allocation2 + $0x90] sm:$0xff]
    %v101 = vld [vmem:[#allocation2 + $0x98] sm:$0xff]
    %v102 = vld [vmem:[#allocation2 + $0xa0] sm:$0xff]
    %v103 = vld [vmem:[#allocation2 + $0xa8] sm:$0xff]
    %v104 = vld [vmem:[#allocation2 + $0xb0] sm:$0xff]
    %v105 = vld [vmem:[#allocation2 + $0xb8] sm:$0xff]
    %v106 = vld [vmem:[#allocation2 + $0xc0] sm:$0xff]
    %v107 = vld [vmem:[#allocation2 + $0xc8] sm:$0xff]
    %v108 = vld [vmem:[#allocation2 + $0xd0] sm:$0xff]
    %v109 = vld [vmem:[#allocation2 + $0xd8] sm:$0xff]
    %v110 = vld [vmem:[#allocation2 + $0xe0] sm:$0xff]
    %v111 = vld [vmem:[#allocation2 + $0xe8] sm:$0xff]
    %v112 = vld [vmem:[#allocation2 + $0xf0] sm:$0xff]
    %v113 = vld [vmem:[#allocation2 + $0xf8] sm:$0xff]
    %v114 = vld [vmem:[#allocation2 + $0x100] sm:$0xff]
    %v115 = vld [vmem:[#allocation2 + $0x108] sm:$0xff]
    %v116 = vld [vmem:[#allocation2 + $0x110] sm:$0xff]
    %v117 = vld [vmem:[#allocation2 + $0x118] sm:$0xff]
    %v118 = vld [vmem:[#allocation2 + $0x120] sm:$0xff]
    %v119 = vld [vmem:[#allocation2 + $0x128] sm:$0xff]
    %v120 = vld [vmem:[#allocation2 + $0x130] sm:$0xff]
    %v121 = vld [vmem:[#allocation2 + $0x138] sm:$0xff]
    %v122 = vld [vmem:[#allocation2 + $0x140] sm:$0xff]
    %v123 = vld [vmem:[#allocation2 + $0x148] sm:$0xff]
    %v124 = vld [vmem:[#allocation2 + $0x150] sm:$0xff]
    %v125 = vld [vmem:[#allocation2 + $0x158] sm:$0xff]
    %v126 = vld [vmem:[#allocation2 + $0x160] sm:$0xff]
    %v127 = vld [vmem:[#allocation2 + $0x168] sm:$0xff]
    %v128 = vld [vmem:[#allocation2 + $0x170] sm:$0xff]
    %v129 = vld [vmem:[#allocation2 + $0x178] sm:$0xff]
    %v130 = vld [vmem:[#allocation2 + $0x180] sm:$0xff]
    %v131 = vld [vmem:[#allocation2 + $0x188] sm:$0xff]
    %v132 = vld [vmem:[#allocation2 + $0x190] sm:$0xff]
    %v133 = vld [vmem:[#allocation2 + $0x198] sm:$0xff]
    %v134 = vld [vmem:[#allocation2 + $0x1a0] sm:$0xff]
    %v135 = vld [vmem:[#allocation2 + $0x1a8] sm:$0xff]
    %v136 = vld [vmem:[#allocation2 + $0x1b0] sm:$0xff]
    %v137 = vld [vmem:[#allocation2 + $0x1b8] sm:$0xff]
    %v138 = vld [vmem:[#allocation2 + $0x1c0] sm:$0xff]
    %v139 = vld [vmem:[#allocation2 + $0x1c8] sm:$0xff]
    %v140 = vld [vmem:[#allocation2 + $0x1d0] sm:$0xff]
    %v141 = vld [vmem:[#allocation2 + $0x1d8] sm:$0xff]
    %v142 = vld [vmem:[#allocation2 + $0x1e0] sm:$0xff]
    %v143 = vld [vmem:[#allocation2 + $0x1e8] sm:$0xff]
    %v144 = vld [vmem:[#allocation2 + $0x1f0] sm:$0xff]
    %v145 = vld [vmem:[#allocation2 + $0x1f8] sm:$0xff]
    %v146 = vld [vmem:[#allocation2 + $0x200] sm:$0xff]
    %v147 = vld [vmem:[#allocation2 + $0x208] sm:$0xff]
    %v148 = vld [vmem:[#allocation2 + $0x210] sm:$0xff]
    %v149 = vld [vmem:[#allocation2 + $0x218] sm:$0xff]
    %v150 = vld [vmem:[#allocation2 + $0x220] sm:$0xff]
    %v151 = vld [vmem:[#allocation2 + $0x228] sm:$0xff]
    %v152 = vld [vmem:[#allocation2 + $0x230] sm:$0xff]
    %v153 = vld [vmem:[#allocation2 + $0x238] sm:$0xff]
    %v154 = vld [vmem:[#allocation2 + $0x240] sm:$0xff]
    %v155 = vld [vmem:[#allocation2 + $0x248] sm:$0xff]
    %v156 = vld [vmem:[#allocation2 + $0x250] sm:$0xff]
    %v157 = vld [vmem:[#allocation2 + $0x258] sm:$0xff]
    %v158 = vld [vmem:[#allocation2 + $0x260] sm:$0xff]
    %v159 = vld [vmem:[#allocation2 + $0x268] sm:$0xff]
    %v160 = vld [vmem:[#allocation2 + $0x270] sm:$0xff]
    %v161 = vld [vmem:[#allocation2 + $0x278] sm:$0xff]
    %v162 = vld [vmem:[#allocation2 + $0x280] sm:$0xff]
    %v163 = vld [vmem:[#allocation2 + $0x288] sm:$0xff]
    %v164 = vld [vmem:[#allocation2 + $0x290] sm:$0xff]
    %v165 = vld [vmem:[#allocation2 + $0x298] sm:$0xff]
    %v166 = vld [vmem:[#allocation2 + $0x2a0] sm:$0xff]
    %v167 = vld [vmem:[#allocation2 + $0x2a8] sm:$0xff]
    %v168 = vld [vmem:[#allocation2 + $0x2b0] sm:$0xff]
    %v169 = vld [vmem:[#allocation2 + $0x2b8] sm:$0xff]
    %v170 = vld [vmem:[#allocation2 + $0x2c0] sm:$0xff]
    %v171 = vld [vmem:[#allocation2 + $0x2c8] sm:$0xff]
    %v172 = vld [vmem:[#allocation2 + $0x2d0] sm:$0xff]
    %v173 = vld [vmem:[#allocation2 + $0x2d8] sm:$0xff]
    %v174 = vld [vmem:[#allocation2 + $0x2e0] sm:$0xff]
    %v175 = vld [vmem:[#allocation2 + $0x2e8] sm:$0xff]
    %v176 = vld [vmem:[#allocation2 + $0x2f0] sm:$0xff]
    %v177 = vld [vmem:[#allocation2 + $0x2f8] sm:$0xff]
    %v178 = vld [vmem:[#allocation2 + $0x300] sm:$0xff]
    %v179 = vld [vmem:[#allocation2 + $0x308] sm:$0xff]
    %v180 = vld [vmem:[#allocation2 + $0x310] sm:$0xff]
    %v181 = vld [vmem:[#allocation2 + $0x318] sm:$0xff]
    %v182 = vld [vmem:[#allocation2 + $0x320] sm:$0xff]
    %v183 = vld [vmem:[#allocation2 + $0x328] sm:$0xff]
    %v184 = vld [vmem:[#allocation2 + $0x330] sm:$0xff]
    %v185 = vld [vmem:[#allocation2 + $0x338] sm:$0xff]
    %v186 = vld [vmem:[#allocation2 + $0x340] sm:$0xff]
    %v187 = vld [vmem:[#allocation2 + $0x348] sm:$0xff]
    %v188 = vld [vmem:[#allocation2 + $0x350] sm:$0xff]
    %v189 = vld [vmem:[#allocation2 + $0x358] sm:$0xff]
    %v190 = vld [vmem:[#allocation2 + $0x360] sm:$0xff]
    %v191 = vld [vmem:[#allocation2 + $0x368] sm:$0xff]
    %v192 = vld [vmem:[#allocation2 + $0x370] sm:$0xff]
    %v193 = vld [vmem:[#allocation2 + $0x378] sm:$0xff]
    %v194 = vld [vmem:[#allocation2 + $0x380] sm:$0xff]
    %v195 = vld [vmem:[#allocation2 + $0x388] sm:$0xff]
    %v196 = vld [vmem:[#allocation2 + $0x390] sm:$0xff]
    %v197 = vld [vmem:[#allocation2 + $0x398] sm:$0xff]
    %v198 = vld [vmem:[#allocation2 + $0x3a0] sm:$0xff]
    %v199 = vld [vmem:[#allocation2 + $0x3a8] sm:$0xff]
    %v200 = vld [vmem:[#allocation2 + $0x3b0] sm:$0xff]
    %v201 = vld [vmem:[#allocation2 + $0x3b8] sm:$0xff]
    %v202 = vld [vmem:[#allocation2 + $0x3c0] sm:$0xff]
    %v203 = vld [vmem:[#allocation2 + $0x3c8] sm:$0xff]
    %v204 = vld [vmem:[#allocation2 + $0x3d0] sm:$0xff]
    %v205 = vld [vmem:[#allocation2 + $0x3d8] sm:$0xff]
    %v206 = vld [vmem:[#allocation2 + $0x3e0] sm:$0xff]
    %v207 = vld [vmem:[#allocation2 + $0x3e8] sm:$0xff]
    %v208 = vld [vmem:[#allocation2 + $0x3f0] sm:$0xff]
    %v209 = vld [vmem:[#allocation2 + $0x3f8] sm:$0xff]
    %v210 = vld [vmem:[#allocation2 + $0x400] sm:$0xff]
    %v211 = vld [vmem:[#allocation2 + $0x408] sm:$0xff]
    %v212 = vld [vmem:[#allocation2 + $0x410] sm:$0xff]
    %v213 = vld [vmem:[#allocation2 + $0x418] sm:$0xff]
    %v214 = vld [vmem:[#allocation2 + $0x420] sm:$0xff]
    %v215 = vld [vmem:[#allocation2 + $0x428] sm:$0xff]
    %v216 = vld [vmem:[#allocation2 + $0x430] sm:$0xff]
    %v217 = vld [vmem:[#allocation2 + $0x438] sm:$0xff]
    %v218 = vld [vmem:[#allocation2 + $0x440] sm:$0xff]
    %v219 = vld [vmem:[#allocation2 + $0x448] sm:$0xff]
    %v220 = vld [vmem:[#allocation2 + $0x450] sm:$0xff]
    %v221 = vld [vmem:[#allocation2 + $0x458] sm:$0xff]
    %v222 = vld [vmem:[#allocation2 + $0x460] sm:$0xff]
    %v223 = vld [vmem:[#allocation2 + $0x468] sm:$0xff]
    %v224 = vld [vmem:[#allocation2 + $0x470] sm:$0xff]
    %v225 = vld [vmem:[#allocation2 + $0x478] sm:$0xff]
    %v226 = vld [vmem:[#allocation2 + $0x480] sm:$0xff]
    %v227 = vld [vmem:[#allocation2 + $0x488] sm:$0xff]
    %v228 = vld [vmem:[#allocation2 + $0x490] sm:$0xff]
    %v229 = vld [vmem:[#allocation2 + $0x498] sm:$0xff]
    %v230 = vld [vmem:[#allocation2 + $0x4a0] sm:$0xff]
    %v231 = vld [vmem:[#allocation2 + $0x4a8] sm:$0xff]
    %v232 = vld [vmem:[#allocation2 + $0x4b0] sm:$0xff]
    %v233 = vld [vmem:[#allocation2 + $0x4b8] sm:$0xff]
    %v234 = vld [vmem:[#allocation2 + $0x4c0] sm:$0xff]
    %v235 = vld [vmem:[#allocation2 + $0x4c8] sm:$0xff]
    %v236 = vld [vmem:[#allocation2 + $0x4d0] sm:$0xff]
    %v237 = vld [vmem:[#allocation2 + $0x4d8] sm:$0xff]
    %v238 = vld [vmem:[#allocation2 + $0x4e0] sm:$0xff]
    %v239 = vld [vmem:[#allocation2 + $0x4e8] sm:$0xff]
    %v240 = vld [vmem:[#allocation2 + $0x4f0] sm:$0xff]
    %v241 = vld [vmem:[#allocation2 + $0x4f8] sm:$0xff]
    %v242 = vld [vmem:[#allocation2 + $0x500] sm:$0xff]
    %v243 = vld [vmem:[#allocation2 + $0x508] sm:$0xff]
    %v244 = vld [vmem:[#allocation2 + $0x510] sm:$0xff]
    %v245 = vld [vmem:[#allocation2 + $0x518] sm:$0xff]
    %v246 = vld [vmem:[#allocation2 + $0x520] sm:$0xff]
    %v247 = vld [vmem:[#allocation2 + $0x528] sm:$0xff]
    %v248 = vld [vmem:[#allocation2 + $0x530] sm:$0xff]
    %v249 = vld [vmem:[#allocation2 + $0x538] sm:$0xff]
    %v250 = vld [vmem:[#allocation2 + $0x540] sm:$0xff]
    %v251 = vld [vmem:[#allocation2 + $0x548] sm:$0xff]
    %v252 = vld [vmem:[#allocation2 + $0x550] sm:$0xff]
    %v253 = vld [vmem:[#allocation2 + $0x558] sm:$0xff]
    %v254 = vld [vmem:[#allocation2 + $0x560] sm:$0xff]
    %v255 = vld [vmem:[#allocation2 + $0x568] sm:$0xff]
    %v256 = vld [vmem:[#allocation2 + $0x570] sm:$0xff]
    %v257 = vld [vmem:[#allocation2 + $0x578] sm:$0xff]
    %v258 = vld [vmem:[#allocation2 + $0x580] sm:$0xff]
    %v259 = vld [vmem:[#allocation2 + $0x588] sm:$0xff]
    %v260 = vld [vmem:[#allocation2 + $0x590] sm:$0xff]
    %v261 = vld [vmem:[#allocation2 + $0x598] sm:$0xff]
    %v262 = vld [vmem:[#allocation2 + $0x5a0] sm:$0xff]
    %v263 = vld [vmem:[#allocation2 + $0x5a8] sm:$0xff]
    %v264 = vld [vmem:[#allocation2 + $0x5b0] sm:$0xff]
    %v265 = vld [vmem:[#allocation2 + $0x5b8] sm:$0xff]
    %v266 = vld [vmem:[#allocation2 + $0x5c0] sm:$0xff]
    %v267 = vld [vmem:[#allocation2 + $0x5c8] sm:$0xff]
    %v268 = vld [vmem:[#allocation2 + $0x5d0] sm:$0xff]
    %v269 = vld [vmem:[#allocation2 + $0x5d8] sm:$0xff]
    %v270 = vld [vmem:[#allocation2 + $0x5e0] sm:$0xff]
    %v271 = vld [vmem:[#allocation2 + $0x5e8] sm:$0xff]
    %v272 = vld [vmem:[#allocation2 + $0x5f0] sm:$0xff]
    %v273 = vld [vmem:[#allocation2 + $0x5f8] sm:$0xff]
    %v274 = vld [vmem:[#allocation2 + $0x600] sm:$0xff]
    %v275 = vld [vmem:[#allocation2 + $0x608] sm:$0xff]
    %v276 = vld [vmem:[#allocation2 + $0x610] sm:$0xff]
    %v277 = vld [vmem:[#allocation2 + $0x618] sm:$0xff]
    %v278 = vld [vmem:[%s2] sm:$0xf]
    %v280 = vlaneseq
    %v281 = vshrl.u32 %v280, 7
    %v282 = vsub.s32 0, %v281
    %v283 = vrot.slane %v278, %v282
    %v284 = vlaneseq
    %v285 = vshrl.u32 %v284, 7
    %v286 = vsub.s32 1, %v285
    %v287 = vrot.slane %v278, %v286
    %v288 = vlaneseq
    %v289 = vshrl.u32 %v288, 7
    %v290 = vsub.s32 2, %v289
    %v291 = vrot.slane %v278, %v290
    %v292 = vlaneseq
    %v293 = vshrl.u32 %v292, 7
    %v294 = vsub.s32 3, %v293
    %v295 = vrot.slane %v278, %v294
    %v308 = vunpack.c.l.b16 %v74
    %v309 = vunpack.c.h.b16 %v74
    %v310 = vunpack.c.l.b16 %v75
    %v311 = vunpack.c.h.b16 %v75
    %v312 = vunpack.c.l.b16 %v76
    %v313 = vunpack.c.h.b16 %v76
    %v314 = vunpack.c.l.b16 %v77
    %v315 = vunpack.c.l.b16 %v78
    %v316 = vunpack.c.h.b16 %v78
    %v317 = vunpack.c.l.b16 %v79
    %v318 = vunpack.c.h.b16 %v79
    %v319 = vunpack.c.l.b16 %v80
    %v320 = vunpack.c.h.b16 %v80
    %v321 = vunpack.c.l.b16 %v81
    %v322 = vpack.c.b16 %v315, %v308
    %v323 = vpack.c.b16 %v316, %v309
    %v324 = vpack.c.b16 %v317, %v310
    %v325 = vpack.c.b16 %v318, %v311
    %v326 = vpack.c.b16 %v319, %v312
    %v327 = vpack.c.b16 %v320, %v313
    %v328 = vpack.c.b16 %v321, %v314
    %v531 = vunpack.c.l.b16 %v82
    %v532 = vunpack.c.h.b16 %v82
    %v533 = vunpack.c.l.b16 %v83
    %v534 = vunpack.c.h.b16 %v83
    %v535 = vunpack.c.l.b16 %v84
    %v536 = vunpack.c.h.b16 %v84
    %v537 = vunpack.c.l.b16 %v85
    %v538 = vunpack.c.h.b16 %v85
    %v539 = vunpack.c.l.b16 %v86
    %v540 = vunpack.c.h.b16 %v86
    %v541 = vunpack.c.l.b16 %v87
    %v542 = vunpack.c.h.b16 %v87
    %v543 = vunpack.c.l.b16 %v88
    %v544 = vunpack.c.h.b16 %v88
    %v545 = vunpack.c.l.b16 %v89
    %v546 = vunpack.c.h.b16 %v89
    %v547 = vunpack.c.l.b16 %v90
    %v548 = vunpack.c.h.b16 %v90
    %v549 = vunpack.c.l.b16 %v91
    %v550 = vunpack.c.h.b16 %v91
    %v551 = vunpack.c.l.b16 %v92
    %v552 = vunpack.c.h.b16 %v92
    %v553 = vunpack.c.l.b16 %v93
    %v554 = vunpack.c.h.b16 %v93
    %v555 = vunpack.c.l.b16 %v94
    %v556 = vunpack.c.h.b16 %v94
    %v557 = vunpack.c.l.b16 %v95
    %v558 = vunpack.c.h.b16 %v95
    %v559 = vunpack.c.l.b16 %v96
    %v560 = vunpack.c.h.b16 %v96
    %v561 = vunpack.c.l.b16 %v97
    %v562 = vunpack.c.h.b16 %v97
    %v563 = vunpack.c.l.b16 %v98
    %v564 = vunpack.c.h.b16 %v98
    %v565 = vunpack.c.l.b16 %v99
    %v566 = vunpack.c.h.b16 %v99
    %v567 = vunpack.c.l.b16 %v100
    %v568 = vunpack.c.h.b16 %v100
    %v569 = vunpack.c.l.b16 %v101
    %v570 = vunpack.c.h.b16 %v101
    %v571 = vunpack.c.l.b16 %v102
    %v572 = vunpack.c.h.b16 %v102
    %v573 = vunpack.c.l.b16 %v103
    %v574 = vunpack.c.h.b16 %v103
    %v575 = vunpack.c.l.b16 %v104
    %v576 = vunpack.c.h.b16 %v104
    %v577 = vunpack.c.l.b16 %v105
    %v578 = vunpack.c.h.b16 %v105
    %v579 = vunpack.c.l.b16 %v106
    %v580 = vunpack.c.h.b16 %v106
    %v581 = vunpack.c.l.b16 %v107
    %v582 = vunpack.c.h.b16 %v107
    %v583 = vunpack.c.l.b16 %v108
    %v584 = vunpack.c.h.b16 %v108
    %v585 = vunpack.c.l.b16 %v109
    %v586 = vunpack.c.h.b16 %v109
    %v587 = vunpack.c.l.b16 %v110
    %v588 = vunpack.c.h.b16 %v110
    %v589 = vunpack.c.l.b16 %v111
    %v590 = vunpack.c.h.b16 %v111
    %v591 = vunpack.c.l.b16 %v112
    %v592 = vunpack.c.h.b16 %v112
    %v593 = vunpack.c.l.b16 %v113
    %v594 = vunpack.c.h.b16 %v113
    %v595 = vunpack.c.l.b16 %v114
    %v596 = vunpack.c.h.b16 %v114
    %v597 = vunpack.c.l.b16 %v115
    %v598 = vunpack.c.h.b16 %v115
    %v599 = vunpack.c.l.b16 %v116
    %v600 = vunpack.c.h.b16 %v116
    %v601 = vunpack.c.l.b16 %v117
    %v602 = vunpack.c.h.b16 %v117
    %v603 = vunpack.c.l.b16 %v118
    %v604 = vunpack.c.h.b16 %v118
    %v605 = vunpack.c.l.b16 %v119
    %v606 = vunpack.c.h.b16 %v119
    %v607 = vunpack.c.l.b16 %v120
    %v608 = vunpack.c.h.b16 %v120
    %v609 = vunpack.c.l.b16 %v121
    %v610 = vunpack.c.h.b16 %v121
    %v611 = vunpack.c.l.b16 %v122
    %v612 = vunpack.c.h.b16 %v122
    %v613 = vunpack.c.l.b16 %v123
    %v614 = vunpack.c.h.b16 %v123
    %v615 = vunpack.c.l.b16 %v124
    %v616 = vunpack.c.h.b16 %v124
    %v617 = vunpack.c.l.b16 %v125
    %v618 = vunpack.c.h.b16 %v125
    %v619 = vunpack.c.l.b16 %v126
    %v620 = vunpack.c.h.b16 %v126
    %v621 = vunpack.c.l.b16 %v127
    %v622 = vunpack.c.h.b16 %v127
    %v623 = vunpack.c.l.b16 %v128
    %v624 = vunpack.c.h.b16 %v128
    %v625 = vunpack.c.l.b16 %v129
    %v626 = vunpack.c.h.b16 %v129
    %v627 = vunpack.c.l.b16 %v130
    %v628 = vunpack.c.h.b16 %v130
    %v629 = vunpack.c.l.b16 %v131
    %v630 = vunpack.c.h.b16 %v131
    %v631 = vunpack.c.l.b16 %v132
    %v632 = vunpack.c.h.b16 %v132
    %v633 = vunpack.c.l.b16 %v133
    %v634 = vunpack.c.h.b16 %v133
    %v635 = vunpack.c.l.b16 %v134
    %v636 = vunpack.c.h.b16 %v134
    %v637 = vunpack.c.l.b16 %v135
    %v638 = vunpack.c.h.b16 %v135
    %v639 = vunpack.c.l.b16 %v136
    %v640 = vunpack.c.h.b16 %v136
    %v641 = vunpack.c.l.b16 %v137
    %v642 = vunpack.c.h.b16 %v137
    %v643 = vunpack.c.l.b16 %v138
    %v644 = vunpack.c.h.b16 %v138
    %v645 = vunpack.c.l.b16 %v139
    %v646 = vunpack.c.h.b16 %v139
    %v647 = vunpack.c.l.b16 %v140
    %v648 = vunpack.c.h.b16 %v140
    %v649 = vunpack.c.l.b16 %v141
    %v650 = vunpack.c.h.b16 %v141
    %v651 = vunpack.c.l.b16 %v142
    %v652 = vunpack.c.h.b16 %v142
    %v653 = vunpack.c.l.b16 %v143
    %v654 = vunpack.c.h.b16 %v143
    %v655 = vunpack.c.l.b16 %v144
    %v656 = vunpack.c.h.b16 %v144
    %v657 = vunpack.c.l.b16 %v145
    %v658 = vunpack.c.h.b16 %v145
    %v659 = vunpack.c.l.b16 %v146
    %v660 = vunpack.c.h.b16 %v146
    %v661 = vunpack.c.l.b16 %v147
    %v662 = vunpack.c.h.b16 %v147
    %v663 = vunpack.c.l.b16 %v148
    %v664 = vunpack.c.h.b16 %v148
    %v665 = vunpack.c.l.b16 %v149
    %v666 = vunpack.c.h.b16 %v149
    %v667 = vunpack.c.l.b16 %v150
    %v668 = vunpack.c.h.b16 %v150
    %v669 = vunpack.c.l.b16 %v151
    %v670 = vunpack.c.h.b16 %v151
    %v671 = vunpack.c.l.b16 %v152
    %v672 = vunpack.c.h.b16 %v152
    %v673 = vunpack.c.l.b16 %v153
    %v674 = vunpack.c.h.b16 %v153
    %v675 = vunpack.c.l.b16 %v154
    %v676 = vunpack.c.h.b16 %v154
    %v677 = vunpack.c.l.b16 %v155
    %v678 = vunpack.c.h.b16 %v155
    %v679 = vunpack.c.l.b16 %v156
    %v680 = vunpack.c.h.b16 %v156
    %v681 = vunpack.c.l.b16 %v157
    %v682 = vunpack.c.h.b16 %v157
    %v683 = vunpack.c.l.b16 %v158
    %v684 = vunpack.c.h.b16 %v158
    %v685 = vunpack.c.l.b16 %v159
    %v686 = vunpack.c.h.b16 %v159
    %v687 = vunpack.c.l.b16 %v160
    %v688 = vunpack.c.h.b16 %v160
    %v689 = vunpack.c.l.b16 %v161
    %v690 = vunpack.c.h.b16 %v161
    %v691 = vunpack.c.l.b16 %v162
    %v692 = vunpack.c.h.b16 %v162
    %v693 = vunpack.c.l.b16 %v163
    %v694 = vunpack.c.h.b16 %v163
    %v695 = vunpack.c.l.b16 %v164
    %v696 = vunpack.c.h.b16 %v164
    %v697 = vunpack.c.l.b16 %v165
    %v698 = vunpack.c.h.b16 %v165
    %v699 = vunpack.c.l.b16 %v166
    %v700 = vunpack.c.h.b16 %v166
    %v701 = vunpack.c.l.b16 %v167
    %v702 = vunpack.c.h.b16 %v167
    %v703 = vunpack.c.l.b16 %v168
    %v704 = vunpack.c.h.b16 %v168
    %v705 = vunpack.c.l.b16 %v169
    %v706 = vunpack.c.h.b16 %v169
    %v707 = vunpack.c.l.b16 %v170
    %v708 = vunpack.c.h.b16 %v170
    %v709 = vunpack.c.l.b16 %v171
    %v710 = vunpack.c.h.b16 %v171
    %v711 = vunpack.c.l.b16 %v172
    %v712 = vunpack.c.h.b16 %v172
    %v713 = vunpack.c.l.b16 %v173
    %v714 = vunpack.c.h.b16 %v173
    %v715 = vunpack.c.l.b16 %v174
    %v716 = vunpack.c.h.b16 %v174
    %v717 = vunpack.c.l.b16 %v175
    %v718 = vunpack.c.h.b16 %v175
    %v719 = vunpack.c.l.b16 %v176
    %v720 = vunpack.c.h.b16 %v176
    %v721 = vunpack.c.l.b16 %v177
    %v722 = vunpack.c.h.b16 %v177
    %v723 = vunpack.c.l.b16 %v178
    %v724 = vunpack.c.h.b16 %v178
    %v725 = vunpack.c.l.b16 %v179
    %v726 = vunpack.c.h.b16 %v179
    %v727 = vunpack.c.l.b16 %v180
    %v728 = vunpack.c.h.b16 %v180
    %v729 = vunpack.c.l.b16 %v181
    %v730 = vunpack.c.h.b16 %v181
    %v731 = vunpack.c.l.b16 %v182
    %v732 = vunpack.c.h.b16 %v182
    %v733 = vunpack.c.l.b16 %v183
    %v734 = vunpack.c.h.b16 %v183
    %v735 = vunpack.c.l.b16 %v184
    %v736 = vunpack.c.h.b16 %v184
    %v737 = vunpack.c.l.b16 %v185
    %v738 = vunpack.c.h.b16 %v185
    %v739 = vunpack.c.l.b16 %v186
    %v740 = vunpack.c.h.b16 %v186
    %v741 = vunpack.c.l.b16 %v187
    %v742 = vunpack.c.h.b16 %v187
    %v743 = vunpack.c.l.b16 %v188
    %v744 = vunpack.c.h.b16 %v188
    %v745 = vunpack.c.l.b16 %v189
    %v746 = vunpack.c.h.b16 %v189
    %v747 = vunpack.c.l.b16 %v190
    %v748 = vunpack.c.h.b16 %v190
    %v749 = vunpack.c.l.b16 %v191
    %v750 = vunpack.c.h.b16 %v191
    %v751 = vunpack.c.l.b16 %v192
    %v752 = vunpack.c.h.b16 %v192
    %v753 = vunpack.c.l.b16 %v193
    %v754 = vunpack.c.h.b16 %v193
    %v755 = vunpack.c.l.b16 %v194
    %v756 = vunpack.c.h.b16 %v194
    %v757 = vunpack.c.l.b16 %v195
    %v758 = vunpack.c.h.b16 %v195
    %v759 = vunpack.c.l.b16 %v196
    %v760 = vunpack.c.h.b16 %v196
    %v761 = vunpack.c.l.b16 %v197
    %v762 = vunpack.c.h.b16 %v197
    %v763 = vunpack.c.l.b16 %v198
    %v764 = vunpack.c.h.b16 %v198
    %v765 = vunpack.c.l.b16 %v199
    %v766 = vunpack.c.h.b16 %v199
    %v767 = vunpack.c.l.b16 %v200
    %v768 = vunpack.c.h.b16 %v200
    %v769 = vunpack.c.l.b16 %v201
    %v770 = vunpack.c.h.b16 %v201
    %v771 = vunpack.c.l.b16 %v202
    %v772 = vunpack.c.h.b16 %v202
    %v773 = vunpack.c.l.b16 %v203
    %v774 = vunpack.c.h.b16 %v203
    %v775 = vunpack.c.l.b16 %v204
    %v776 = vunpack.c.h.b16 %v204
    %v777 = vunpack.c.l.b16 %v205
    %v778 = vunpack.c.h.b16 %v205
    %v779 = vunpack.c.l.b16 %v206
    %v780 = vunpack.c.h.b16 %v206
    %v781 = vunpack.c.l.b16 %v207
    %v782 = vunpack.c.h.b16 %v207
    %v783 = vunpack.c.l.b16 %v208
    %v784 = vunpack.c.h.b16 %v208
    %v785 = vunpack.c.l.b16 %v209
    %v786 = vunpack.c.h.b16 %v209
    %v787 = vunpack.c.l.b16 %v210
    %v788 = vunpack.c.h.b16 %v210
    %v789 = vunpack.c.l.b16 %v211
    %v790 = vunpack.c.h.b16 %v211
    %v791 = vunpack.c.l.b16 %v212
    %v792 = vunpack.c.h.b16 %v212
    %v793 = vunpack.c.l.b16 %v213
    %v794 = vunpack.c.h.b16 %v213
    %v795 = vunpack.c.l.b16 %v214
    %v796 = vunpack.c.h.b16 %v214
    %v797 = vunpack.c.l.b16 %v215
    %v798 = vunpack.c.h.b16 %v215
    %v799 = vunpack.c.l.b16 %v216
    %v800 = vunpack.c.h.b16 %v216
    %v801 = vunpack.c.l.b16 %v217
    %v802 = vunpack.c.h.b16 %v217
    %v803 = vunpack.c.l.b16 %v218
    %v804 = vunpack.c.h.b16 %v218
    %v805 = vunpack.c.l.b16 %v219
    %v806 = vunpack.c.h.b16 %v219
    %v807 = vunpack.c.l.b16 %v220
    %v808 = vunpack.c.h.b16 %v220
    %v809 = vunpack.c.l.b16 %v221
    %v810 = vunpack.c.h.b16 %v221
    %v811 = vunpack.c.l.b16 %v222
    %v812 = vunpack.c.h.b16 %v222
    %v813 = vunpack.c.l.b16 %v223
    %v814 = vunpack.c.h.b16 %v223
    %v815 = vunpack.c.l.b16 %v224
    %v816 = vunpack.c.h.b16 %v224
    %v817 = vunpack.c.l.b16 %v225
    %v818 = vunpack.c.h.b16 %v225
    %v819 = vunpack.c.l.b16 %v226
    %v820 = vunpack.c.h.b16 %v226
    %v821 = vunpack.c.l.b16 %v227
    %v822 = vunpack.c.h.b16 %v227
    %v823 = vunpack.c.l.b16 %v228
    %v824 = vunpack.c.h.b16 %v228
    %v825 = vunpack.c.l.b16 %v229
    %v826 = vunpack.c.h.b16 %v229
    %v827 = vunpack.c.l.b16 %v230
    %v828 = vunpack.c.h.b16 %v230
    %v829 = vunpack.c.l.b16 %v231
    %v830 = vunpack.c.h.b16 %v231
    %v831 = vunpack.c.l.b16 %v232
    %v832 = vunpack.c.h.b16 %v232
    %v833 = vunpack.c.l.b16 %v233
    %v834 = vunpack.c.h.b16 %v233
    %v835 = vunpack.c.l.b16 %v234
    %v836 = vunpack.c.h.b16 %v234
    %v837 = vunpack.c.l.b16 %v235
    %v838 = vunpack.c.h.b16 %v235
    %v839 = vunpack.c.l.b16 %v236
    %v840 = vunpack.c.h.b16 %v236
    %v841 = vunpack.c.l.b16 %v237
    %v842 = vunpack.c.h.b16 %v237
    %v843 = vunpack.c.l.b16 %v238
    %v844 = vunpack.c.h.b16 %v238
    %v845 = vunpack.c.l.b16 %v239
    %v846 = vunpack.c.h.b16 %v239
    %v847 = vunpack.c.l.b16 %v240
    %v848 = vunpack.c.h.b16 %v240
    %v849 = vunpack.c.l.b16 %v241
    %v850 = vunpack.c.h.b16 %v241
    %v851 = vunpack.c.l.b16 %v242
    %v852 = vunpack.c.h.b16 %v242
    %v853 = vunpack.c.l.b16 %v243
    %v854 = vunpack.c.h.b16 %v243
    %v855 = vunpack.c.l.b16 %v244
    %v856 = vunpack.c.h.b16 %v244
    %v857 = vunpack.c.l.b16 %v245
    %v858 = vunpack.c.h.b16 %v245
    %v859 = vunpack.c.l.b16 %v246
    %v860 = vunpack.c.h.b16 %v246
    %v861 = vunpack.c.l.b16 %v247
    %v862 = vunpack.c.h.b16 %v247
    %v863 = vunpack.c.l.b16 %v248
    %v864 = vunpack.c.h.b16 %v248
    %v865 = vunpack.c.l.b16 %v249
    %v866 = vunpack.c.h.b16 %v249
    %v867 = vunpack.c.l.b16 %v250
    %v868 = vunpack.c.h.b16 %v250
    %v869 = vunpack.c.l.b16 %v251
    %v870 = vunpack.c.h.b16 %v251
    %v871 = vunpack.c.l.b16 %v252
    %v872 = vunpack.c.h.b16 %v252
    %v873 = vunpack.c.l.b16 %v253
    %v874 = vunpack.c.h.b16 %v253
    %v875 = vunpack.c.l.b16 %v254
    %v876 = vunpack.c.h.b16 %v254
    %v877 = vunpack.c.l.b16 %v255
    %v878 = vunpack.c.h.b16 %v255
    %v879 = vunpack.c.l.b16 %v256
    %v880 = vunpack.c.h.b16 %v256
    %v881 = vunpack.c.l.b16 %v257
    %v882 = vunpack.c.h.b16 %v257
    %v883 = vunpack.c.l.b16 %v258
    %v884 = vunpack.c.h.b16 %v258
    %v885 = vunpack.c.l.b16 %v259
    %v886 = vunpack.c.h.b16 %v259
    %v887 = vunpack.c.l.b16 %v260
    %v888 = vunpack.c.h.b16 %v260
    %v889 = vunpack.c.l.b16 %v261
    %v890 = vunpack.c.h.b16 %v261
    %v891 = vunpack.c.l.b16 %v262
    %v892 = vunpack.c.h.b16 %v262
    %v893 = vunpack.c.l.b16 %v263
    %v894 = vunpack.c.h.b16 %v263
    %v895 = vunpack.c.l.b16 %v264
    %v896 = vunpack.c.h.b16 %v264
    %v897 = vunpack.c.l.b16 %v265
    %v898 = vunpack.c.h.b16 %v265
    %v899 = vunpack.c.l.b16 %v266
    %v900 = vunpack.c.h.b16 %v266
    %v901 = vunpack.c.l.b16 %v267
    %v902 = vunpack.c.h.b16 %v267
    %v903 = vunpack.c.l.b16 %v268
    %v904 = vunpack.c.h.b16 %v268
    %v905 = vunpack.c.l.b16 %v269
    %v906 = vunpack.c.h.b16 %v269
    %v907 = vunpack.c.l.b16 %v270
    %v908 = vunpack.c.h.b16 %v270
    %v909 = vunpack.c.l.b16 %v271
    %v910 = vunpack.c.h.b16 %v271
    %v911 = vunpack.c.l.b16 %v272
    %v912 = vunpack.c.h.b16 %v272
    %v913 = vunpack.c.l.b16 %v273
    %v914 = vunpack.c.h.b16 %v273
    %v915 = vunpack.c.l.b16 %v274
    %v916 = vunpack.c.h.b16 %v274
    %v917 = vunpack.c.l.b16 %v275
    %v918 = vunpack.c.h.b16 %v275
    %v919 = vunpack.c.l.b16 %v276
    %v920 = vunpack.c.h.b16 %v276
    %v921 = vunpack.c.l.b16 %v277
    %v922 = vunpack.c.h.b16 %v277
    %v923 = vpack.c.b16 %v535, %v531
    %v924 = vpack.c.b16 %v536, %v532
    %v925 = vpack.c.b16 %v537, %v533
    %v926 = vpack.c.b16 %v538, %v534
    %v927 = vpack.c.b16 %v543, %v539
    %v928 = vpack.c.b16 %v544, %v540
    %v929 = vpack.c.b16 %v545, %v541
    %v930 = vpack.c.b16 %v546, %v542
    %v931 = vpack.c.b16 %v551, %v547
    %v932 = vpack.c.b16 %v552, %v548
    %v933 = vpack.c.b16 %v553, %v549
    %v934 = vpack.c.b16 %v554, %v550
    %v935 = vpack.c.b16 %v559, %v555
    %v936 = vpack.c.b16 %v560, %v556
    %v937 = vpack.c.b16 %v561, %v557
    %v938 = vpack.c.b16 %v562, %v558
    %v939 = vpack.c.b16 %v567, %v563
    %v940 = vpack.c.b16 %v568, %v564
    %v941 = vpack.c.b16 %v569, %v565
    %v942 = vpack.c.b16 %v570, %v566
    %v943 = vpack.c.b16 %v575, %v571
    %v944 = vpack.c.b16 %v576, %v572
    %v945 = vpack.c.b16 %v577, %v573
    %v946 = vpack.c.b16 %v578, %v574
    %v947 = vpack.c.b16 %v583, %v579
    %v948 = vpack.c.b16 %v584, %v580
    %v949 = vpack.c.b16 %v585, %v581
    %v950 = vpack.c.b16 %v586, %v582
    %v951 = vpack.c.b16 %v591, %v587
    %v952 = vpack.c.b16 %v592, %v588
    %v953 = vpack.c.b16 %v593, %v589
    %v954 = vpack.c.b16 %v594, %v590
    %v955 = vpack.c.b16 %v599, %v595
    %v956 = vpack.c.b16 %v600, %v596
    %v957 = vpack.c.b16 %v601, %v597
    %v958 = vpack.c.b16 %v602, %v598
    %v959 = vpack.c.b16 %v607, %v603
    %v960 = vpack.c.b16 %v608, %v604
    %v961 = vpack.c.b16 %v609, %v605
    %v962 = vpack.c.b16 %v610, %v606
    %v963 = vpack.c.b16 %v615, %v611
    %v964 = vpack.c.b16 %v616, %v612
    %v965 = vpack.c.b16 %v617, %v613
    %v966 = vpack.c.b16 %v618, %v614
    %v967 = vpack.c.b16 %v623, %v619
    %v968 = vpack.c.b16 %v624, %v620
    %v969 = vpack.c.b16 %v625, %v621
    %v970 = vpack.c.b16 %v626, %v622
    %v971 = vpack.c.b16 %v631, %v627
    %v972 = vpack.c.b16 %v632, %v628
    %v973 = vpack.c.b16 %v633, %v629
    %v974 = vpack.c.b16 %v634, %v630
    %v975 = vpack.c.b16 %v639, %v635
    %v976 = vpack.c.b16 %v640, %v636
    %v977 = vpack.c.b16 %v641, %v637
    %v978 = vpack.c.b16 %v642, %v638
    %v979 = vpack.c.b16 %v647, %v643
    %v980 = vpack.c.b16 %v648, %v644
    %v981 = vpack.c.b16 %v649, %v645
    %v982 = vpack.c.b16 %v650, %v646
    %v983 = vpack.c.b16 %v655, %v651
    %v984 = vpack.c.b16 %v656, %v652
    %v985 = vpack.c.b16 %v657, %v653
    %v986 = vpack.c.b16 %v658, %v654
    %v987 = vpack.c.b16 %v663, %v659
    %v988 = vpack.c.b16 %v664, %v660
    %v989 = vpack.c.b16 %v665, %v661
    %v990 = vpack.c.b16 %v666, %v662
    %v991 = vpack.c.b16 %v671, %v667
    %v992 = vpack.c.b16 %v672, %v668
    %v993 = vpack.c.b16 %v673, %v669
    %v994 = vpack.c.b16 %v674, %v670
    %v995 = vpack.c.b16 %v679, %v675
    %v996 = vpack.c.b16 %v680, %v676
    %v997 = vpack.c.b16 %v681, %v677
    %v998 = vpack.c.b16 %v682, %v678
    %v999 = vpack.c.b16 %v687, %v683
    %v1000 = vpack.c.b16 %v688, %v684
    %v1001 = vpack.c.b16 %v689, %v685
    %v1002 = vpack.c.b16 %v690, %v686
    %v1003 = vpack.c.b16 %v695, %v691
    %v1004 = vpack.c.b16 %v696, %v692
    %v1005 = vpack.c.b16 %v697, %v693
    %v1006 = vpack.c.b16 %v698, %v694
    %v1007 = vpack.c.b16 %v703, %v699
    %v1008 = vpack.c.b16 %v704, %v700
    %v1009 = vpack.c.b16 %v705, %v701
    %v1010 = vpack.c.b16 %v706, %v702
    %v1011 = vpack.c.b16 %v711, %v707
    %v1012 = vpack.c.b16 %v712, %v708
    %v1013 = vpack.c.b16 %v713, %v709
    %v1014 = vpack.c.b16 %v714, %v710
    %v1015 = vpack.c.b16 %v719, %v715
    %v1016 = vpack.c.b16 %v720, %v716
    %v1017 = vpack.c.b16 %v721, %v717
    %v1018 = vpack.c.b16 %v722, %v718
    %v1019 = vpack.c.b16 %v727, %v723
    %v1020 = vpack.c.b16 %v728, %v724
    %v1021 = vpack.c.b16 %v729, %v725
    %v1022 = vpack.c.b16 %v730, %v726
    %v1023 = vpack.c.b16 %v735, %v731
    %v1024 = vpack.c.b16 %v736, %v732
    %v1025 = vpack.c.b16 %v737, %v733
    %v1026 = vpack.c.b16 %v738, %v734
    %v1027 = vpack.c.b16 %v743, %v739
    %v1028 = vpack.c.b16 %v744, %v740
    %v1029 = vpack.c.b16 %v745, %v741
    %v1030 = vpack.c.b16 %v746, %v742
    %v1031 = vpack.c.b16 %v751, %v747
    %v1032 = vpack.c.b16 %v752, %v748
    %v1033 = vpack.c.b16 %v753, %v749
    %v1034 = vpack.c.b16 %v754, %v750
    %v1035 = vpack.c.b16 %v759, %v755
    %v1036 = vpack.c.b16 %v760, %v756
    %v1037 = vpack.c.b16 %v761, %v757
    %v1038 = vpack.c.b16 %v762, %v758
    %v1039 = vpack.c.b16 %v767, %v763
    %v1040 = vpack.c.b16 %v768, %v764
    %v1041 = vpack.c.b16 %v769, %v765
    %v1042 = vpack.c.b16 %v770, %v766
    %v1043 = vpack.c.b16 %v775, %v771
    %v1044 = vpack.c.b16 %v776, %v772
    %v1045 = vpack.c.b16 %v777, %v773
    %v1046 = vpack.c.b16 %v778, %v774
    %v1047 = vpack.c.b16 %v783, %v779
    %v1048 = vpack.c.b16 %v784, %v780
    %v1049 = vpack.c.b16 %v785, %v781
    %v1050 = vpack.c.b16 %v786, %v782
    %v1051 = vpack.c.b16 %v791, %v787
    %v1052 = vpack.c.b16 %v792, %v788
    %v1053 = vpack.c.b16 %v793, %v789
    %v1054 = vpack.c.b16 %v794, %v790
    %v1055 = vpack.c.b16 %v799, %v795
    %v1056 = vpack.c.b16 %v800, %v796
    %v1057 = vpack.c.b16 %v801, %v797
    %v1058 = vpack.c.b16 %v802, %v798
    %v1059 = vpack.c.b16 %v807, %v803
    %v1060 = vpack.c.b16 %v808, %v804
    %v1061 = vpack.c.b16 %v809, %v805
    %v1062 = vpack.c.b16 %v810, %v806
    %v1063 = vpack.c.b16 %v815, %v811
    %v1064 = vpack.c.b16 %v816, %v812
    %v1065 = vpack.c.b16 %v817, %v813
    %v1066 = vpack.c.b16 %v818, %v814
    %v1067 = vpack.c.b16 %v823, %v819
    %v1068 = vpack.c.b16 %v824, %v820
    %v1069 = vpack.c.b16 %v825, %v821
    %v1070 = vpack.c.b16 %v826, %v822
    %v1071 = vpack.c.b16 %v831, %v827
    %v1072 = vpack.c.b16 %v832, %v828
    %v1073 = vpack.c.b16 %v833, %v829
    %v1074 = vpack.c.b16 %v834, %v830
    %v1075 = vpack.c.b16 %v839, %v835
    %v1076 = vpack.c.b16 %v840, %v836
    %v1077 = vpack.c.b16 %v841, %v837
    %v1078 = vpack.c.b16 %v842, %v838
    %v1079 = vpack.c.b16 %v847, %v843
    %v1080 = vpack.c.b16 %v848, %v844
    %v1081 = vpack.c.b16 %v849, %v845
    %v1082 = vpack.c.b16 %v850, %v846
    %v1083 = vpack.c.b16 %v855, %v851
    %v1084 = vpack.c.b16 %v856, %v852
    %v1085 = vpack.c.b16 %v857, %v853
    %v1086 = vpack.c.b16 %v858, %v854
    %v1087 = vpack.c.b16 %v863, %v859
    %v1088 = vpack.c.b16 %v864, %v860
    %v1089 = vpack.c.b16 %v865, %v861
    %v1090 = vpack.c.b16 %v866, %v862
    %v1091 = vpack.c.b16 %v871, %v867
    %v1092 = vpack.c.b16 %v872, %v868
    %v1093 = vpack.c.b16 %v873, %v869
    %v1094 = vpack.c.b16 %v874, %v870
    %v1095 = vpack.c.b16 %v879, %v875
    %v1096 = vpack.c.b16 %v880, %v876
    %v1097 = vpack.c.b16 %v881, %v877
    %v1098 = vpack.c.b16 %v882, %v878
    %v1099 = vpack.c.b16 %v887, %v883
    %v1100 = vpack.c.b16 %v888, %v884
    %v1101 = vpack.c.b16 %v889, %v885
    %v1102 = vpack.c.b16 %v890, %v886
    %v1103 = vpack.c.b16 %v895, %v891
    %v1104 = vpack.c.b16 %v896, %v892
    %v1105 = vpack.c.b16 %v897, %v893
    %v1106 = vpack.c.b16 %v898, %v894
    %v1107 = vpack.c.b16 %v903, %v899
    %v1108 = vpack.c.b16 %v904, %v900
    %v1109 = vpack.c.b16 %v905, %v901
    %v1110 = vpack.c.b16 %v906, %v902
    %v1111 = vpack.c.b16 %v911, %v907
    %v1112 = vpack.c.b16 %v912, %v908
    %v1113 = vpack.c.b16 %v913, %v909
    %v1114 = vpack.c.b16 %v914, %v910
    %v1115 = vpack.c.b16 %v919, %v915
    %v1116 = vpack.c.b16 %v920, %v916
    %v1117 = vpack.c.b16 %v921, %v917
    %v1118 = vpack.c.b16 %v922, %v918
    %vm1315 = vcmask 130048
    %v1317 = vsel %vm1315, %v328, 0
    %1319 = vmatprep.subr.bf16.mxu0 %v952
    %1320 = vmatpush1.bf16.msra.mxu0 %v951
    %1321 = vmatprep.subr.bf16.mxu0 %v948
    %1322 = vmatpush1.bf16.msra.mxu0 %v947
    %1323 = vmatprep.subr.bf16.mxu0 %v944
    %1324 = vmatpush1.bf16.msra.mxu0 %v943
    %1325 = vmatprep.subr.bf16.mxu0 %v940
    %1326 = vmatpush1.bf16.msra.mxu0 %v939
    %1327 = vmatprep.subr.bf16.mxu0 %v936
    %1328 = vmatpush1.bf16.msra.mxu0 %v935
    %1329 = vmatprep.subr.bf16.mxu0 %v932
    %1330 = vmatpush1.bf16.msra.mxu0 %v931
    %1331 = vmatprep.subr.bf16.mxu0 %v928
    %1332 = vmatpush1.bf16.msra.mxu0 %v927
    %1333 = vmatprep.subr.bf16.mxu0 %v924
    %1334 = vmatpush1.bf16.msra.mxu0 %v923
    %1335 = vmatprep.subr.bf16.mxu0 %v984
    %1336 = vmatpush2.bf16.msra.mxu0 %v983
    %1337 = vmatprep.subr.bf16.mxu0 %v980
    %1338 = vmatpush2.bf16.msra.mxu0 %v979
    %1339 = vmatprep.subr.bf16.mxu0 %v976
    %1340 = vmatpush2.bf16.msra.mxu0 %v975
    %1341 = vmatprep.subr.bf16.mxu0 %v972
    %1342 = vmatpush2.bf16.msra.mxu0 %v971
    %1343 = vmatprep.subr.bf16.mxu0 %v968
    %1344 = vmatpush2.bf16.msra.mxu0 %v967
    %1345 = vmatprep.subr.bf16.mxu0 %v964
    %1346 = vmatpush2.bf16.msra.mxu0 %v963
    %1347 = vmatprep.subr.bf16.mxu0 %v960
    %1348 = vmatpush2.bf16.msra.mxu0 %v959
    %1349 = vmatprep.subr.bf16.mxu0 %v956
    %1350 = vmatpush2.bf16.msra.mxu0 %v955
    %1351 = vmatprep.mubr.bf16.mxu0 %v323
    %1352 = vmatmul.mubr.bf16.gmra.mxu0 %v322
    %v1353 = vpop.f32.mrf.mxu0
    %v1354 = vadd.f32 %v283, %v1353
    %v1355 = vpop.f32.mrf.mxu0
    %v1356 = vadd.f32 %v287, %v1355
    %v1357 = vpop.f32.mrf.mxu0
    %v1358 = vadd.f32 %v283, %v1357
    %v1359 = vpop.f32.mrf.mxu0
    %v1360 = vadd.f32 %v287, %v1359
    %1361 = vdwg.mxu0
    %1362 = vmatprep.subr.bf16.mxu0 %v1016
    %1363 = vmatpush1.bf16.msra.mxu0 %v1015
    %1364 = vmatprep.subr.bf16.mxu0 %v1012
    %1365 = vmatpush1.bf16.msra.mxu0 %v1011
    %1366 = vmatprep.subr.bf16.mxu0 %v1008
    %1367 = vmatpush1.bf16.msra.mxu0 %v1007
    %1368 = vmatprep.subr.bf16.mxu0 %v1004
    %1369 = vmatpush1.bf16.msra.mxu0 %v1003
    %1370 = vmatprep.subr.bf16.mxu0 %v1000
    %1371 = vmatpush1.bf16.msra.mxu0 %v999
    %1372 = vmatprep.subr.bf16.mxu0 %v996
    %1373 = vmatpush1.bf16.msra.mxu0 %v995
    %1374 = vmatprep.subr.bf16.mxu0 %v992
    %1375 = vmatpush1.bf16.msra.mxu0 %v991
    %1376 = vmatprep.subr.bf16.mxu0 %v988
    %1377 = vmatpush1.bf16.msra.mxu0 %v987
    %1378 = vmatprep.subr.bf16.mxu0 %v1048
    %1379 = vmatpush2.bf16.msra.mxu0 %v1047
    %1380 = vmatprep.subr.bf16.mxu0 %v1044
    %1381 = vmatpush2.bf16.msra.mxu0 %v1043
    %1382 = vmatprep.subr.bf16.mxu0 %v1040
    %1383 = vmatpush2.bf16.msra.mxu0 %v1039
    %1384 = vmatprep.subr.bf16.mxu0 %v1036
    %1385 = vmatpush2.bf16.msra.mxu0 %v1035
    %1386 = vmatprep.subr.bf16.mxu0 %v1032
    %1387 = vmatpush2.bf16.msra.mxu0 %v1031
    %1388 = vmatprep.subr.bf16.mxu0 %v1028
    %1389 = vmatpush2.bf16.msra.mxu0 %v1027
    %1390 = vmatprep.subr.bf16.mxu0 %v1024
    %1391 = vmatpush2.bf16.msra.mxu0 %v1023
    %1392 = vmatprep.subr.bf16.mxu0 %v1020
    %1393 = vmatpush2.bf16.msra.mxu0 %v1019
    %1394 = vmatprep.mubr.bf16.mxu0 %v325
    %1395 = vmatmul.mubr.bf16.gmra.mxu0 %v324
    %v1396 = vpop.f32.mrf.mxu0
    %v1397 = vadd.f32 %v1354, %v1396
    %v1398 = vpop.f32.mrf.mxu0
    %v1399 = vadd.f32 %v1356, %v1398
    %v1400 = vpop.f32.mrf.mxu0
    %v1401 = vadd.f32 %v1358, %v1400
    %v1402 = vpop.f32.mrf.mxu0
    %v1403 = vadd.f32 %v1360, %v1402
    %1404 = vdwg.mxu0
    %1405 = vmatprep.subr.bf16.mxu0 %v1080
    %1406 = vmatpush1.bf16.msra.mxu0 %v1079
    %1407 = vmatprep.subr.bf16.mxu0 %v1076
    %1408 = vmatpush1.bf16.msra.mxu0 %v1075
    %1409 = vmatprep.subr.bf16.mxu0 %v1072
    %1410 = vmatpush1.bf16.msra.mxu0 %v1071
    %1411 = vmatprep.subr.bf16.mxu0 %v1068
    %1412 = vmatpush1.bf16.msra.mxu0 %v1067
    %1413 = vmatprep.subr.bf16.mxu0 %v1064
    %1414 = vmatpush1.bf16.msra.mxu0 %v1063
    %1415 = vmatprep.subr.bf16.mxu0 %v1060
    %1416 = vmatpush1.bf16.msra.mxu0 %v1059
    %1417 = vmatprep.subr.bf16.mxu0 %v1056
    %1418 = vmatpush1.bf16.msra.mxu0 %v1055
    %1419 = vmatprep.subr.bf16.mxu0 %v1052
    %1420 = vmatpush1.bf16.msra.mxu0 %v1051
    %1421 = vmatprep.subr.bf16.mxu0 %v1112
    %1422 = vmatpush2.bf16.msra.mxu0 %v1111
    %1423 = vmatprep.subr.bf16.mxu0 %v1108
    %1424 = vmatpush2.bf16.msra.mxu0 %v1107
    %1425 = vmatprep.subr.bf16.mxu0 %v1104
    %1426 = vmatpush2.bf16.msra.mxu0 %v1103
    %1427 = vmatprep.subr.bf16.mxu0 %v1100
    %1428 = vmatpush2.bf16.msra.mxu0 %v1099
    %1429 = vmatprep.subr.bf16.mxu0 %v1096
    %1430 = vmatpush2.bf16.msra.mxu0 %v1095
    %1431 = vmatprep.subr.bf16.mxu0 %v1092
    %1432 = vmatpush2.bf16.msra.mxu0 %v1091
    %1433 = vmatprep.subr.bf16.mxu0 %v1088
    %1434 = vmatpush2.bf16.msra.mxu0 %v1087
    %1435 = vmatprep.subr.bf16.mxu0 %v1084
    %1436 = vmatpush2.bf16.msra.mxu0 %v1083
    %1437 = vmatprep.mubr.bf16.mxu0 %v327
    %1438 = vmatmul.mubr.bf16.gmra.mxu0 %v326
    %v1439 = vpop.f32.mrf.mxu0
    %v1440 = vadd.f32 %v1397, %v1439
    %v1441 = vpop.f32.mrf.mxu0
    %v1442 = vadd.f32 %v1399, %v1441
    %v1443 = vpop.f32.mrf.mxu0
    %v1444 = vadd.f32 %v1401, %v1443
    %v1445 = vpop.f32.mrf.mxu0
    %v1446 = vadd.f32 %v1403, %v1445
    %1447 = vdwg.mxu0
    %1448 = vmatprep.subr.bf16.mxu0 0
    %1449 = vmatpush1.bf16.msra.mxu0 0
    %1450 = vmatprep.subr.bf16.mxu0 0
    %1451 = vmatpush1.bf16.msra.mxu0 0
    %1452 = vmatprep.subr.bf16.mxu0 0
    %1453 = vmatpush1.bf16.msra.mxu0 0
    %1454 = vmatprep.subr.bf16.mxu0 0
    %1455 = vmatpush1.bf16.msra.mxu0 0
    %1456 = vmatprep.subr.bf16.mxu0 0
    %1457 = vmatpush1.bf16.msra.mxu0 0
    %1458 = vmatprep.subr.bf16.mxu0 0
    %1459 = vmatpush1.bf16.msra.mxu0 0
    %1460 = vmatprep.subr.bf16.mxu0 0
    %1461 = vmatpush1.bf16.msra.mxu0 0
    %1462 = vmatprep.subr.bf16.mxu0 %v1116
    %1463 = vmatpush1.bf16.msra.mxu0 %v1115
    %1464 = vmatprep.subr.bf16.mxu0 0
    %1465 = vmatpush2.bf16.msra.mxu0 0
    %1466 = vmatprep.subr.bf16.mxu0 0
    %1467 = vmatpush2.bf16.msra.mxu0 0
    %1468 = vmatprep.subr.bf16.mxu0 0
    %1469 = vmatpush2.bf16.msra.mxu0 0
    %1470 = vmatprep.subr.bf16.mxu0 0
    %1471 = vmatpush2.bf16.msra.mxu0 0
    %1472 = vmatprep.subr.bf16.mxu0 0
    %1473 = vmatpush2.bf16.msra.mxu0 0
    %1474 = vmatprep.subr.bf16.mxu0 0
    %1475 = vmatpush2.bf16.msra.mxu0 0
    %1476 = vmatprep.subr.bf16.mxu0 0
    %1477 = vmatpush2.bf16.msra.mxu0 0
    %1478 = vmatprep.subr.bf16.mxu0 0
    %1479 = vmatpush2.bf16.msra.mxu0 0
    %1480 = vmatprep.mubr.bf16.mxu0 0
    %1481 = vmatmul.mubr.bf16.gmra.mxu0 %v1317
    %v1482 = vpop.f32.mrf.mxu0
    %v1483 = vadd.f32 %v1440, %v1482
    %v1484 = vpop.f32.mrf.mxu0
    %v1485 = vadd.f32 %v1442, %v1484
    %v1486 = vpop.f32.mrf.mxu0
    %v1487 = vadd.f32 %v1444, %v1486
    %v1488 = vpop.f32.mrf.mxu0
    %v1489 = vadd.f32 %v1446, %v1488
    %1490 = vdwg.mxu0
    %1491 = vmatprep.subr.bf16.mxu0 %v954
    %1492 = vmatpush1.bf16.msra.mxu0 %v953
    %1493 = vmatprep.subr.bf16.mxu0 %v950
    %1494 = vmatpush1.bf16.msra.mxu0 %v949
    %1495 = vmatprep.subr.bf16.mxu0 %v946
    %1496 = vmatpush1.bf16.msra.mxu0 %v945
    %1497 = vmatprep.subr.bf16.mxu0 %v942
    %1498 = vmatpush1.bf16.msra.mxu0 %v941
    %1499 = vmatprep.subr.bf16.mxu0 %v938
    %1500 = vmatpush1.bf16.msra.mxu0 %v937
    %1501 = vmatprep.subr.bf16.mxu0 %v934
    %1502 = vmatpush1.bf16.msra.mxu0 %v933
    %1503 = vmatprep.subr.bf16.mxu0 %v930
    %1504 = vmatpush1.bf16.msra.mxu0 %v929
    %1505 = vmatprep.subr.bf16.mxu0 %v926
    %1506 = vmatpush1.bf16.msra.mxu0 %v925
    %1507 = vmatprep.subr.bf16.mxu0 %v986
    %1508 = vmatpush2.bf16.msra.mxu0 %v985
    %1509 = vmatprep.subr.bf16.mxu0 %v982
    %1510 = vmatpush2.bf16.msra.mxu0 %v981
    %1511 = vmatprep.subr.bf16.mxu0 %v978
    %1512 = vmatpush2.bf16.msra.mxu0 %v977
    %1513 = vmatprep.subr.bf16.mxu0 %v974
    %1514 = vmatpush2.bf16.msra.mxu0 %v973
    %1515 = vmatprep.subr.bf16.mxu0 %v970
    %1516 = vmatpush2.bf16.msra.mxu0 %v969
    %1517 = vmatprep.subr.bf16.mxu0 %v966
    %1518 = vmatpush2.bf16.msra.mxu0 %v965
    %1519 = vmatprep.subr.bf16.mxu0 %v962
    %1520 = vmatpush2.bf16.msra.mxu0 %v961
    %1521 = vmatprep.subr.bf16.mxu0 %v958
    %1522 = vmatpush2.bf16.msra.mxu0 %v957
    %1523 = vmatprep.mubr.bf16.mxu0 %v323
    %1524 = vmatmul.mubr.bf16.gmra.mxu0 %v322
    %v1525 = vpop.f32.mrf.mxu0
    %v1526 = vadd.f32 %v291, %v1525
    %v1527 = vpop.f32.mrf.mxu0
    %v1528 = vadd.f32 %v295, %v1527
    %v1529 = vpop.f32.mrf.mxu0
    %v1530 = vadd.f32 %v291, %v1529
    %v1531 = vpop.f32.mrf.mxu0
    %v1532 = vadd.f32 %v295, %v1531
    %1533 = vdwg.mxu0
    %1534 = vmatprep.subr.bf16.mxu0 %v1018
    %1535 = vmatpush1.bf16.msra.mxu0 %v1017
    %1536 = vmatprep.subr.bf16.mxu0 %v1014
    %1537 = vmatpush1.bf16.msra.mxu0 %v1013
    %1538 = vmatprep.subr.bf16.mxu0 %v1010
    %1539 = vmatpush1.bf16.msra.mxu0 %v1009
    %1540 = vmatprep.subr.bf16.mxu0 %v1006
    %1541 = vmatpush1.bf16.msra.mxu0 %v1005
    %1542 = vmatprep.subr.bf16.mxu0 %v1002
    %1543 = vmatpush1.bf16.msra.mxu0 %v1001
    %1544 = vmatprep.subr.bf16.mxu0 %v998
    %1545 = vmatpush1.bf16.msra.mxu0 %v997
    %1546 = vmatprep.subr.bf16.mxu0 %v994
    %1547 = vmatpush1.bf16.msra.mxu0 %v993
    %1548 = vmatprep.subr.bf16.mxu0 %v990
    %1549 = vmatpush1.bf16.msra.mxu0 %v989
    %1550 = vmatprep.subr.bf16.mxu0 %v1050
    %1551 = vmatpush2.bf16.msra.mxu0 %v1049
    %1552 = vmatprep.subr.bf16.mxu0 %v1046
    %1553 = vmatpush2.bf16.msra.mxu0 %v1045
    %1554 = vmatprep.subr.bf16.mxu0 %v1042
    %1555 = vmatpush2.bf16.msra.mxu0 %v1041
    %1556 = vmatprep.subr.bf16.mxu0 %v1038
    %1557 = vmatpush2.bf16.msra.mxu0 %v1037
    %1558 = vmatprep.subr.bf16.mxu0 %v1034
    %1559 = vmatpush2.bf16.msra.mxu0 %v1033
    %1560 = vmatprep.subr.bf16.mxu0 %v1030
    %1561 = vmatpush2.bf16.msra.mxu0 %v1029
    %1562 = vmatprep.subr.bf16.mxu0 %v1026
    %1563 = vmatpush2.bf16.msra.mxu0 %v1025
    %1564 = vmatprep.subr.bf16.mxu0 %v1022
    %1565 = vmatpush2.bf16.msra.mxu0 %v1021
    %1566 = vmatprep.mubr.bf16.mxu0 %v325
    %1567 = vmatmul.mubr.bf16.gmra.mxu0 %v324
    %v1568 = vpop.f32.mrf.mxu0
    %v1569 = vadd.f32 %v1526, %v1568
    %v1570 = vpop.f32.mrf.mxu0
    %v1571 = vadd.f32 %v1528, %v1570
    %v1572 = vpop.f32.mrf.mxu0
    %v1573 = vadd.f32 %v1530, %v1572
    %v1574 = vpop.f32.mrf.mxu0
    %v1575 = vadd.f32 %v1532, %v1574
    %1576 = vdwg.mxu0
    %1577 = vmatprep.subr.bf16.mxu0 %v1082
    %1578 = vmatpush1.bf16.msra.mxu0 %v1081
    %1579 = vmatprep.subr.bf16.mxu0 %v1078
    %1580 = vmatpush1.bf16.msra.mxu0 %v1077
    %1581 = vmatprep.subr.bf16.mxu0 %v1074
    %1582 = vmatpush1.bf16.msra.mxu0 %v1073
    %1583 = vmatprep.subr.bf16.mxu0 %v1070
    %1584 = vmatpush1.bf16.msra.mxu0 %v1069
    %1585 = vmatprep.subr.bf16.mxu0 %v1066
    %1586 = vmatpush1.bf16.msra.mxu0 %v1065
    %1587 = vmatprep.subr.bf16.mxu0 %v1062
    %1588 = vmatpush1.bf16.msra.mxu0 %v1061
    %1589 = vmatprep.subr.bf16.mxu0 %v1058
    %1590 = vmatpush1.bf16.msra.mxu0 %v1057
    %1591 = vmatprep.subr.bf16.mxu0 %v1054
    %1592 = vmatpush1.bf16.msra.mxu0 %v1053
    %1593 = vmatprep.subr.bf16.mxu0 %v1114
    %1594 = vmatpush2.bf16.msra.mxu0 %v1113
    %1595 = vmatprep.subr.bf16.mxu0 %v1110
    %1596 = vmatpush2.bf16.msra.mxu0 %v1109
    %1597 = vmatprep.subr.bf16.mxu0 %v1106
    %1598 = vmatpush2.bf16.msra.mxu0 %v1105
    %1599 = vmatprep.subr.bf16.mxu0 %v1102
    %1600 = vmatpush2.bf16.msra.mxu0 %v1101
    %1601 = vmatprep.subr.bf16.mxu0 %v1098
    %1602 = vmatpush2.bf16.msra.mxu0 %v1097
    %1603 = vmatprep.subr.bf16.mxu0 %v1094
    %1604 = vmatpush2.bf16.msra.mxu0 %v1093
    %1605 = vmatprep.subr.bf16.mxu0 %v1090
    %1606 = vmatpush2.bf16.msra.mxu0 %v1089
    %1607 = vmatprep.subr.bf16.mxu0 %v1086
    %1608 = vmatpush2.bf16.msra.mxu0 %v1085
    %1609 = vmatprep.mubr.bf16.mxu0 %v327
    %1610 = vmatmul.mubr.bf16.gmra.mxu0 %v326
    %v1611 = vpop.f32.mrf.mxu0
    %v1612 = vadd.f32 %v1569, %v1611
    %v1613 = vpop.f32.mrf.mxu0
    %v1614 = vadd.f32 %v1571, %v1613
    %v1615 = vpop.f32.mrf.mxu0
    %v1616 = vadd.f32 %v1573, %v1615
    %v1617 = vpop.f32.mrf.mxu0
    %v1618 = vadd.f32 %v1575, %v1617
    %1619 = vdwg.mxu0
    %1620 = vmatprep.subr.bf16.mxu0 0
    %1621 = vmatpush1.bf16.msra.mxu0 0
    %1622 = vmatprep.subr.bf16.mxu0 0
    %1623 = vmatpush1.bf16.msra.mxu0 0
    %1624 = vmatprep.subr.bf16.mxu0 0
    %1625 = vmatpush1.bf16.msra.mxu0 0
    %1626 = vmatprep.subr.bf16.mxu0 0
    %1627 = vmatpush1.bf16.msra.mxu0 0
    %1628 = vmatprep.subr.bf16.mxu0 0
    %1629 = vmatpush1.bf16.msra.mxu0 0
    %1630 = vmatprep.subr.bf16.mxu0 0
    %1631 = vmatpush1.bf16.msra.mxu0 0
    %1632 = vmatprep.subr.bf16.mxu0 0
    %1633 = vmatpush1.bf16.msra.mxu0 0
    %1634 = vmatprep.subr.bf16.mxu0 %v1118
    %1635 = vmatpush1.bf16.msra.mxu0 %v1117
    %1636 = vmatprep.subr.bf16.mxu0 0
    %1637 = vmatpush2.bf16.msra.mxu0 0
    %1638 = vmatprep.subr.bf16.mxu0 0
    %1639 = vmatpush2.bf16.msra.mxu0 0
    %1640 = vmatprep.subr.bf16.mxu0 0
    %1641 = vmatpush2.bf16.msra.mxu0 0
    %1642 = vmatprep.subr.bf16.mxu0 0
    %1643 = vmatpush2.bf16.msra.mxu0 0
    %1644 = vmatprep.subr.bf16.mxu0 0
    %1645 = vmatpush2.bf16.msra.mxu0 0
    %1646 = vmatprep.subr.bf16.mxu0 0
    %1647 = vmatpush2.bf16.msra.mxu0 0
    %1648 = vmatprep.subr.bf16.mxu0 0
    %1649 = vmatpush2.bf16.msra.mxu0 0
    %1650 = vmatprep.subr.bf16.mxu0 0
    %1651 = vmatpush2.bf16.msra.mxu0 0
    %1652 = vmatprep.mubr.bf16.mxu0 0
    %1653 = vmatmul.mubr.bf16.gmra.mxu0 %v1317
    %v1654 = vpop.f32.mrf.mxu0
    %v1655 = vadd.f32 %v1612, %v1654
    %v1656 = vpop.f32.mrf.mxu0
    %v1657 = vadd.f32 %v1614, %v1656
    %v1658 = vpop.f32.mrf.mxu0
    %v1659 = vadd.f32 %v1616, %v1658
    %v1660 = vpop.f32.mrf.mxu0
    %v1661 = vadd.f32 %v1618, %v1660
    %1662 = vdwg.mxu0
    %v1663 = vmax.f32 %v1483, 0.0
    %v1664 = vmax.f32 %v1485, 0.0
    %v1665 = vmax.f32 %v1655, 0.0
    %v1666 = vmax.f32 %v1657, 0.0
    %v1667 = vmax.f32 %v1487, 0.0
    %v1668 = vmax.f32 %v1489, 0.0
    %v1669 = vmax.f32 %v1659, 0.0
    %v1670 = vmax.f32 %v1661, 0.0
    %v1671 = vpack.c.bf16 %v1667, %v1663
    %v1672 = vpack.c.bf16 %v1668, %v1664
    %v1673 = vpack.c.bf16 %v1669, %v1665
    %v1674 = vpack.c.bf16 %v1670, %v1666
    %v1675 = vld [vmem:[#allocation4] sm:$0xff]
    %v1676 = vld [vmem:[#allocation4 + $0x8] sm:$0xf]
    %v1677 = vld [vmem:[#allocation4 + $0xc] sm:$0xff]
    %v1678 = vld [vmem:[#allocation4 + $0x14] sm:$0xf]
    %v1679 = vld [vmem:[#allocation4 + $0x18] sm:$0xff]
    %v1680 = vld [vmem:[#allocation4 + $0x20] sm:$0xf]
    %v1681 = vld [vmem:[#allocation4 + $0x24] sm:$0xff]
    %v1682 = vld [vmem:[#allocation4 + $0x2c] sm:$0xf]
    %v1683 = vld [vmem:[#allocation4 + $0x30] sm:$0xff]
    %v1684 = vld [vmem:[#allocation4 + $0x38] sm:$0xf]
    %v1685 = vld [vmem:[#allocation4 + $0x3c] sm:$0xff]
    %v1686 = vld [vmem:[#allocation4 + $0x44] sm:$0xf]
    %v1687 = vld [vmem:[#allocation4 + $0x48] sm:$0xff]
    %v1688 = vld [vmem:[#allocation4 + $0x50] sm:$0xf]
    %v1689 = vld [vmem:[#allocation4 + $0x54] sm:$0xff]
    %v1690 = vld [vmem:[#allocation4 + $0x5c] sm:$0xf]
    %v1691 = vld [vmem:[#allocation4 + $0x60] sm:$0xff]
    %v1692 = vld [vmem:[#allocation4 + $0x68] sm:$0xf]
    %v1693 = vld [vmem:[#allocation4 + $0x6c] sm:$0xff]
    %v1694 = vld [vmem:[#allocation4 + $0x74] sm:$0xf]
    %v1695 = vld [vmem:[#allocation4 + $0x78] sm:$0xff]
    %v1696 = vld [vmem:[#allocation4 + $0x80] sm:$0xf]
    %v1697 = vld [vmem:[#allocation4 + $0x84] sm:$0xff]
    %v1698 = vld [vmem:[#allocation4 + $0x8c] sm:$0xf]
    %v1699 = vld [vmem:[#allocation4 + $0x90] sm:$0xff]
    %v1700 = vld [vmem:[#allocation4 + $0x98] sm:$0xf]
    %v1701 = vld [vmem:[#allocation4 + $0x9c] sm:$0xff]
    %v1702 = vld [vmem:[#allocation4 + $0xa4] sm:$0xf]
    %v1703 = vld [vmem:[#allocation4 + $0xa8] sm:$0xff]
    %v1704 = vld [vmem:[#allocation4 + $0xb0] sm:$0xf]
    %v1705 = vld [vmem:[#allocation4 + $0xb4] sm:$0xff]
    %v1706 = vld [vmem:[#allocation4 + $0xbc] sm:$0xf]
    %v1707 = vld [vmem:[#allocation4 + $0xc0] sm:$0xff]
    %v1708 = vld [vmem:[#allocation4 + $0xc8] sm:$0xf]
    %v1709 = vld [vmem:[#allocation4 + $0xcc] sm:$0xff]
    %v1710 = vld [vmem:[#allocation4 + $0xd4] sm:$0xf]
    %v1711 = vld [vmem:[#allocation4 + $0xd8] sm:$0xff]
    %v1712 = vld [vmem:[#allocation4 + $0xe0] sm:$0xf]
    %v1713 = vld [vmem:[#allocation4 + $0xe4] sm:$0xff]
    %v1714 = vld [vmem:[#allocation4 + $0xec] sm:$0xf]
    %v1715 = vld [vmem:[#allocation4 + $0xf0] sm:$0xff]
    %v1716 = vld [vmem:[#allocation4 + $0xf8] sm:$0xf]
    %v1717 = vld [vmem:[#allocation4 + $0xfc] sm:$0xff]
    %v1718 = vld [vmem:[#allocation4 + $0x104] sm:$0xf]
    %v1719 = vld [vmem:[#allocation4 + $0x108] sm:$0xff]
    %v1720 = vld [vmem:[#allocation4 + $0x110] sm:$0xf]
    %v1721 = vld [vmem:[#allocation4 + $0x114] sm:$0xff]
    %v1722 = vld [vmem:[#allocation4 + $0x11c] sm:$0xf]
    %v1723 = vld [vmem:[#allocation4 + $0x120] sm:$0xff]
    %v1724 = vld [vmem:[#allocation4 + $0x128] sm:$0xf]
    %v1725 = vld [vmem:[#allocation4 + $0x12c] sm:$0xff]
    %v1726 = vld [vmem:[#allocation4 + $0x134] sm:$0xf]
    %v1727 = vld [vmem:[#allocation4 + $0x138] sm:$0xff]
    %v1728 = vld [vmem:[#allocation4 + $0x140] sm:$0xf]
    %v1729 = vld [vmem:[#allocation4 + $0x144] sm:$0xff]
    %v1730 = vld [vmem:[#allocation4 + $0x14c] sm:$0xf]
    %v1731 = vld [vmem:[#allocation4 + $0x150] sm:$0xff]
    %v1732 = vld [vmem:[#allocation4 + $0x158] sm:$0xf]
    %v1733 = vld [vmem:[#allocation4 + $0x15c] sm:$0xff]
    %v1734 = vld [vmem:[#allocation4 + $0x164] sm:$0xf]
    %v1735 = vld [vmem:[#allocation4 + $0x168] sm:$0xff]
    %v1736 = vld [vmem:[#allocation4 + $0x170] sm:$0xf]
    %v1737 = vld [vmem:[#allocation4 + $0x174] sm:$0xff]
    %v1738 = vld [vmem:[#allocation4 + $0x17c] sm:$0xf]
    %v1739 = vld [vmem:[#allocation4 + $0x180] sm:$0xff]
    %v1740 = vld [vmem:[#allocation4 + $0x188] sm:$0xf]
    %v1741 = vld [vmem:[#allocation4 + $0x18c] sm:$0xff]
    %v1742 = vld [vmem:[#allocation4 + $0x194] sm:$0xf]
    %v1743 = vld [vmem:[#allocation4 + $0x198] sm:$0xff]
    %v1744 = vld [vmem:[#allocation4 + $0x1a0] sm:$0xf]
    %v1745 = vld [vmem:[#allocation4 + $0x1a4] sm:$0xff]
    %v1746 = vld [vmem:[#allocation4 + $0x1ac] sm:$0xf]
    %v1747 = vld [vmem:[#allocation4 + $0x1b0] sm:$0xff]
    %v1748 = vld [vmem:[#allocation4 + $0x1b8] sm:$0xf]
    %v1749 = vld [vmem:[#allocation4 + $0x1bc] sm:$0xff]
    %v1750 = vld [vmem:[#allocation4 + $0x1c4] sm:$0xf]
    %v1751 = vld [vmem:[#allocation4 + $0x1c8] sm:$0xff]
    %v1752 = vld [vmem:[#allocation4 + $0x1d0] sm:$0xf]
    %v1753 = vld [vmem:[#allocation4 + $0x1d4] sm:$0xff]
    %v1754 = vld [vmem:[#allocation4 + $0x1dc] sm:$0xf]
    %v1755 = vld [vmem:[#allocation4 + $0x1e0] sm:$0xff]
    %v1756 = vld [vmem:[#allocation4 + $0x1e8] sm:$0xf]
    %v1757 = vld [vmem:[#allocation4 + $0x1ec] sm:$0xff]
    %v1758 = vld [vmem:[#allocation4 + $0x1f4] sm:$0xf]
    %v1759 = vld [vmem:[#allocation4 + $0x1f8] sm:$0xff]
    %v1760 = vld [vmem:[#allocation4 + $0x200] sm:$0xf]
    %v1761 = vld [vmem:[#allocation4 + $0x204] sm:$0xff]
    %v1762 = vld [vmem:[#allocation4 + $0x20c] sm:$0xf]
    %v1763 = vld [vmem:[#allocation4 + $0x210] sm:$0xff]
    %v1764 = vld [vmem:[#allocation4 + $0x218] sm:$0xf]
    %v1765 = vld [vmem:[#allocation4 + $0x21c] sm:$0xff]
    %v1766 = vld [vmem:[#allocation4 + $0x224] sm:$0xf]
    %v1767 = vld [vmem:[#allocation4 + $0x228] sm:$0xff]
    %v1768 = vld [vmem:[#allocation4 + $0x230] sm:$0xf]
    %v1769 = vld [vmem:[#allocation4 + $0x234] sm:$0xff]
    %v1770 = vld [vmem:[#allocation4 + $0x23c] sm:$0xf]
    %v1771 = vld [vmem:[#allocation4 + $0x240] sm:$0xff]
    %v1772 = vld [vmem:[#allocation4 + $0x248] sm:$0xf]
    %v1773 = vld [vmem:[#allocation4 + $0x24c] sm:$0xff]
    %v1774 = vld [vmem:[#allocation4 + $0x254] sm:$0xf]
    %v1775 = vld [vmem:[#allocation4 + $0x258] sm:$0xff]
    %v1776 = vld [vmem:[#allocation4 + $0x260] sm:$0xf]
    %v1777 = vld [vmem:[#allocation4 + $0x264] sm:$0xff]
    %v1778 = vld [vmem:[#allocation4 + $0x26c] sm:$0xf]
    %v1779 = vld [vmem:[#allocation4 + $0x270] sm:$0xff]
    %v1780 = vld [vmem:[#allocation4 + $0x278] sm:$0xf]
    %v1781 = vld [vmem:[#allocation4 + $0x27c] sm:$0xff]
    %v1782 = vld [vmem:[#allocation4 + $0x284] sm:$0xf]
    %v1783 = vld [vmem:[#allocation4 + $0x288] sm:$0xff]
    %v1784 = vld [vmem:[#allocation4 + $0x290] sm:$0xf]
    %v1785 = vld [vmem:[#allocation4 + $0x294] sm:$0xff]
    %v1786 = vld [vmem:[#allocation4 + $0x29c] sm:$0xf]
    %v1787 = vld [vmem:[#allocation4 + $0x2a0] sm:$0xff]
    %v1788 = vld [vmem:[#allocation4 + $0x2a8] sm:$0xf]
    %v1789 = vld [vmem:[#allocation4 + $0x2ac] sm:$0xff]
    %v1790 = vld [vmem:[#allocation4 + $0x2b4] sm:$0xf]
    %v1791 = vld [vmem:[#allocation4 + $0x2b8] sm:$0xff]
    %v1792 = vld [vmem:[#allocation4 + $0x2c0] sm:$0xf]
    %v1793 = vld [vmem:[#allocation4 + $0x2c4] sm:$0xff]
    %v1794 = vld [vmem:[#allocation4 + $0x2cc] sm:$0xf]
    %v1795 = vld [vmem:[#allocation4 + $0x2d0] sm:$0xff]
    %v1796 = vld [vmem:[#allocation4 + $0x2d8] sm:$0xf]
    %v1797 = vld [vmem:[#allocation4 + $0x2dc] sm:$0xff]
    %v1798 = vld [vmem:[#allocation4 + $0x2e4] sm:$0xf]
    %v1799 = vld [vmem:[#allocation4 + $0x2e8] sm:$0xff]
    %v1800 = vld [vmem:[#allocation4 + $0x2f0] sm:$0xf]
    %v1801 = vld [vmem:[#allocation4 + $0x2f4] sm:$0xff]
    %v1802 = vld [vmem:[#allocation4 + $0x2fc] sm:$0xf]
    %v1803 = vld [vmem:[%s4] sm:$0x7]
    %v1805 = vlaneseq
    %v1806 = vshrl.u32 %v1805, 7
    %v1807 = vsub.s32 0, %v1806
    %v1808 = vrot.slane %v1803, %v1807
    %v1809 = vlaneseq
    %v1810 = vshrl.u32 %v1809, 7
    %v1811 = vsub.s32 1, %v1810
    %v1812 = vrot.slane %v1803, %v1811
    %v1813 = vlaneseq
    %v1814 = vshrl.u32 %v1813, 7
    %v1815 = vsub.s32 2, %v1814
    %v1816 = vrot.slane %v1803, %v1815
    %v1948 = vunpack.c.l.b16 %v1675
    %v1949 = vunpack.c.h.b16 %v1675
    %v1950 = vunpack.c.l.b16 %v1676
    %v1951 = vunpack.c.l.b16 %v1677
    %v1952 = vunpack.c.h.b16 %v1677
    %v1953 = vunpack.c.l.b16 %v1678
    %v1954 = vunpack.c.l.b16 %v1679
    %v1955 = vunpack.c.h.b16 %v1679
    %v1956 = vunpack.c.l.b16 %v1680
    %v1957 = vunpack.c.l.b16 %v1681
    %v1958 = vunpack.c.h.b16 %v1681
    %v1959 = vunpack.c.l.b16 %v1682
    %v1960 = vunpack.c.l.b16 %v1683
    %v1961 = vunpack.c.h.b16 %v1683
    %v1962 = vunpack.c.l.b16 %v1684
    %v1963 = vunpack.c.l.b16 %v1685
    %v1964 = vunpack.c.h.b16 %v1685
    %v1965 = vunpack.c.l.b16 %v1686
    %v1966 = vunpack.c.l.b16 %v1687
    %v1967 = vunpack.c.h.b16 %v1687
    %v1968 = vunpack.c.l.b16 %v1688
    %v1969 = vunpack.c.l.b16 %v1689
    %v1970 = vunpack.c.h.b16 %v1689
    %v1971 = vunpack.c.l.b16 %v1690
    %v1972 = vunpack.c.l.b16 %v1691
    %v1973 = vunpack.c.h.b16 %v1691
    %v1974 = vunpack.c.l.b16 %v1692
    %v1975 = vunpack.c.l.b16 %v1693
    %v1976 = vunpack.c.h.b16 %v1693
    %v1977 = vunpack.c.l.b16 %v1694
    %v1978 = vunpack.c.l.b16 %v1695
    %v1979 = vunpack.c.h.b16 %v1695
    %v1980 = vunpack.c.l.b16 %v1696
    %v1981 = vunpack.c.l.b16 %v1697
    %v1982 = vunpack.c.h.b16 %v1697
    %v1983 = vunpack.c.l.b16 %v1698
    %v1984 = vunpack.c.l.b16 %v1699
    %v1985 = vunpack.c.h.b16 %v1699
    %v1986 = vunpack.c.l.b16 %v1700
    %v1987 = vunpack.c.l.b16 %v1701
    %v1988 = vunpack.c.h.b16 %v1701
    %v1989 = vunpack.c.l.b16 %v1702
    %v1990 = vunpack.c.l.b16 %v1703
    %v1991 = vunpack.c.h.b16 %v1703
    %v1992 = vunpack.c.l.b16 %v1704
    %v1993 = vunpack.c.l.b16 %v1705
    %v1994 = vunpack.c.h.b16 %v1705
    %v1995 = vunpack.c.l.b16 %v1706
    %v1996 = vunpack.c.l.b16 %v1707
    %v1997 = vunpack.c.h.b16 %v1707
    %v1998 = vunpack.c.l.b16 %v1708
    %v1999 = vunpack.c.l.b16 %v1709
    %v2000 = vunpack.c.h.b16 %v1709
    %v2001 = vunpack.c.l.b16 %v1710
    %v2002 = vunpack.c.l.b16 %v1711
    %v2003 = vunpack.c.h.b16 %v1711
    %v2004 = vunpack.c.l.b16 %v1712
    %v2005 = vunpack.c.l.b16 %v1713
    %v2006 = vunpack.c.h.b16 %v1713
    %v2007 = vunpack.c.l.b16 %v1714
    %v2008 = vunpack.c.l.b16 %v1715
    %v2009 = vunpack.c.h.b16 %v1715
    %v2010 = vunpack.c.l.b16 %v1716
    %v2011 = vunpack.c.l.b16 %v1717
    %v2012 = vunpack.c.h.b16 %v1717
    %v2013 = vunpack.c.l.b16 %v1718
    %v2014 = vunpack.c.l.b16 %v1719
    %v2015 = vunpack.c.h.b16 %v1719
    %v2016 = vunpack.c.l.b16 %v1720
    %v2017 = vunpack.c.l.b16 %v1721
    %v2018 = vunpack.c.h.b16 %v1721
    %v2019 = vunpack.c.l.b16 %v1722
    %v2020 = vunpack.c.l.b16 %v1723
    %v2021 = vunpack.c.h.b16 %v1723
    %v2022 = vunpack.c.l.b16 %v1724
    %v2023 = vunpack.c.l.b16 %v1725
    %v2024 = vunpack.c.h.b16 %v1725
    %v2025 = vunpack.c.l.b16 %v1726
    %v2026 = vunpack.c.l.b16 %v1727
    %v2027 = vunpack.c.h.b16 %v1727
    %v2028 = vunpack.c.l.b16 %v1728
    %v2029 = vunpack.c.l.b16 %v1729
    %v2030 = vunpack.c.h.b16 %v1729
    %v2031 = vunpack.c.l.b16 %v1730
    %v2032 = vunpack.c.l.b16 %v1731
    %v2033 = vunpack.c.h.b16 %v1731
    %v2034 = vunpack.c.l.b16 %v1732
    %v2035 = vunpack.c.l.b16 %v1733
    %v2036 = vunpack.c.h.b16 %v1733
    %v2037 = vunpack.c.l.b16 %v1734
    %v2038 = vunpack.c.l.b16 %v1735
    %v2039 = vunpack.c.h.b16 %v1735
    %v2040 = vunpack.c.l.b16 %v1736
    %v2041 = vunpack.c.l.b16 %v1737
    %v2042 = vunpack.c.h.b16 %v1737
    %v2043 = vunpack.c.l.b16 %v1738
    %v2044 = vunpack.c.l.b16 %v1739
    %v2045 = vunpack.c.h.b16 %v1739
    %v2046 = vunpack.c.l.b16 %v1740
    %v2047 = vunpack.c.l.b16 %v1741
    %v2048 = vunpack.c.h.b16 %v1741
    %v2049 = vunpack.c.l.b16 %v1742
    %v2050 = vunpack.c.l.b16 %v1743
    %v2051 = vunpack.c.h.b16 %v1743
    %v2052 = vunpack.c.l.b16 %v1744
    %v2053 = vunpack.c.l.b16 %v1745
    %v2054 = vunpack.c.h.b16 %v1745
    %v2055 = vunpack.c.l.b16 %v1746
    %v2056 = vunpack.c.l.b16 %v1747
    %v2057 = vunpack.c.h.b16 %v1747
    %v2058 = vunpack.c.l.b16 %v1748
    %v2059 = vunpack.c.l.b16 %v1749
    %v2060 = vunpack.c.h.b16 %v1749
    %v2061 = vunpack.c.l.b16 %v1750
    %v2062 = vunpack.c.l.b16 %v1751
    %v2063 = vunpack.c.h.b16 %v1751
    %v2064 = vunpack.c.l.b16 %v1752
    %v2065 = vunpack.c.l.b16 %v1753
    %v2066 = vunpack.c.h.b16 %v1753
    %v2067 = vunpack.c.l.b16 %v1754
    %v2068 = vunpack.c.l.b16 %v1755
    %v2069 = vunpack.c.h.b16 %v1755
    %v2070 = vunpack.c.l.b16 %v1756
    %v2071 = vunpack.c.l.b16 %v1757
    %v2072 = vunpack.c.h.b16 %v1757
    %v2073 = vunpack.c.l.b16 %v1758
    %v2074 = vunpack.c.l.b16 %v1759
    %v2075 = vunpack.c.h.b16 %v1759
    %v2076 = vunpack.c.l.b16 %v1760
    %v2077 = vunpack.c.l.b16 %v1761
    %v2078 = vunpack.c.h.b16 %v1761
    %v2079 = vunpack.c.l.b16 %v1762
    %v2080 = vunpack.c.l.b16 %v1763
    %v2081 = vunpack.c.h.b16 %v1763
    %v2082 = vunpack.c.l.b16 %v1764
    %v2083 = vunpack.c.l.b16 %v1765
    %v2084 = vunpack.c.h.b16 %v1765
    %v2085 = vunpack.c.l.b16 %v1766
    %v2086 = vunpack.c.l.b16 %v1767
    %v2087 = vunpack.c.h.b16 %v1767
    %v2088 = vunpack.c.l.b16 %v1768
    %v2089 = vunpack.c.l.b16 %v1769
    %v2090 = vunpack.c.h.b16 %v1769
    %v2091 = vunpack.c.l.b16 %v1770
    %v2092 = vunpack.c.l.b16 %v1771
    %v2093 = vunpack.c.h.b16 %v1771
    %v2094 = vunpack.c.l.b16 %v1772
    %v2095 = vunpack.c.l.b16 %v1773
    %v2096 = vunpack.c.h.b16 %v1773
    %v2097 = vunpack.c.l.b16 %v1774
    %v2098 = vunpack.c.l.b16 %v1775
    %v2099 = vunpack.c.h.b16 %v1775
    %v2100 = vunpack.c.l.b16 %v1776
    %v2101 = vunpack.c.l.b16 %v1777
    %v2102 = vunpack.c.h.b16 %v1777
    %v2103 = vunpack.c.l.b16 %v1778
    %v2104 = vunpack.c.l.b16 %v1779
    %v2105 = vunpack.c.h.b16 %v1779
    %v2106 = vunpack.c.l.b16 %v1780
    %v2107 = vunpack.c.l.b16 %v1781
    %v2108 = vunpack.c.h.b16 %v1781
    %v2109 = vunpack.c.l.b16 %v1782
    %v2110 = vunpack.c.l.b16 %v1783
    %v2111 = vunpack.c.h.b16 %v1783
    %v2112 = vunpack.c.l.b16 %v1784
    %v2113 = vunpack.c.l.b16 %v1785
    %v2114 = vunpack.c.h.b16 %v1785
    %v2115 = vunpack.c.l.b16 %v1786
    %v2116 = vunpack.c.l.b16 %v1787
    %v2117 = vunpack.c.h.b16 %v1787
    %v2118 = vunpack.c.l.b16 %v1788
    %v2119 = vunpack.c.l.b16 %v1789
    %v2120 = vunpack.c.h.b16 %v1789
    %v2121 = vunpack.c.l.b16 %v1790
    %v2122 = vunpack.c.l.b16 %v1791
    %v2123 = vunpack.c.h.b16 %v1791
    %v2124 = vunpack.c.l.b16 %v1792
    %v2125 = vunpack.c.l.b16 %v1793
    %v2126 = vunpack.c.h.b16 %v1793
    %v2127 = vunpack.c.l.b16 %v1794
    %v2128 = vunpack.c.l.b16 %v1795
    %v2129 = vunpack.c.h.b16 %v1795
    %v2130 = vunpack.c.l.b16 %v1796
    %v2131 = vunpack.c.l.b16 %v1797
    %v2132 = vunpack.c.h.b16 %v1797
    %v2133 = vunpack.c.l.b16 %v1798
    %v2134 = vunpack.c.l.b16 %v1799
    %v2135 = vunpack.c.h.b16 %v1799
    %v2136 = vunpack.c.l.b16 %v1800
    %v2137 = vunpack.c.l.b16 %v1801
    %v2138 = vunpack.c.h.b16 %v1801
    %v2139 = vunpack.c.l.b16 %v1802
    %v2140 = vpack.c.b16 %v1951, %v1948
    %v2141 = vpack.c.b16 %v1952, %v1949
    %v2142 = vpack.c.b16 %v1953, %v1950
    %v2143 = vpack.c.b16 %v1957, %v1954
    %v2144 = vpack.c.b16 %v1958, %v1955
    %v2145 = vpack.c.b16 %v1959, %v1956
    %v2146 = vpack.c.b16 %v1963, %v1960
    %v2147 = vpack.c.b16 %v1964, %v1961
    %v2148 = vpack.c.b16 %v1965, %v1962
    %v2149 = vpack.c.b16 %v1969, %v1966
    %v2150 = vpack.c.b16 %v1970, %v1967
    %v2151 = vpack.c.b16 %v1971, %v1968
    %v2152 = vpack.c.b16 %v1975, %v1972
    %v2153 = vpack.c.b16 %v1976, %v1973
    %v2154 = vpack.c.b16 %v1977, %v1974
    %v2155 = vpack.c.b16 %v1981, %v1978
    %v2156 = vpack.c.b16 %v1982, %v1979
    %v2157 = vpack.c.b16 %v1983, %v1980
    %v2158 = vpack.c.b16 %v1987, %v1984
    %v2159 = vpack.c.b16 %v1988, %v1985
    %v2160 = vpack.c.b16 %v1989, %v1986
    %v2161 = vpack.c.b16 %v1993, %v1990
    %v2162 = vpack.c.b16 %v1994, %v1991
    %v2163 = vpack.c.b16 %v1995, %v1992
    %v2164 = vpack.c.b16 %v1999, %v1996
    %v2165 = vpack.c.b16 %v2000, %v1997
    %v2166 = vpack.c.b16 %v2001, %v1998
    %v2167 = vpack.c.b16 %v2005, %v2002
    %v2168 = vpack.c.b16 %v2006, %v2003
    %v2169 = vpack.c.b16 %v2007, %v2004
    %v2170 = vpack.c.b16 %v2011, %v2008
    %v2171 = vpack.c.b16 %v2012, %v2009
    %v2172 = vpack.c.b16 %v2013, %v2010
    %v2173 = vpack.c.b16 %v2017, %v2014
    %v2174 = vpack.c.b16 %v2018, %v2015
    %v2175 = vpack.c.b16 %v2019, %v2016
    %v2176 = vpack.c.b16 %v2023, %v2020
    %v2177 = vpack.c.b16 %v2024, %v2021
    %v2178 = vpack.c.b16 %v2025, %v2022
    %v2179 = vpack.c.b16 %v2029, %v2026
    %v2180 = vpack.c.b16 %v2030, %v2027
    %v2181 = vpack.c.b16 %v2031, %v2028
    %v2182 = vpack.c.b16 %v2035, %v2032
    %v2183 = vpack.c.b16 %v2036, %v2033
    %v2184 = vpack.c.b16 %v2037, %v2034
    %v2185 = vpack.c.b16 %v2041, %v2038
    %v2186 = vpack.c.b16 %v2042, %v2039
    %v2187 = vpack.c.b16 %v2043, %v2040
    %v2188 = vpack.c.b16 %v2047, %v2044
    %v2189 = vpack.c.b16 %v2048, %v2045
    %v2190 = vpack.c.b16 %v2049, %v2046
    %v2191 = vpack.c.b16 %v2053, %v2050
    %v2192 = vpack.c.b16 %v2054, %v2051
    %v2193 = vpack.c.b16 %v2055, %v2052
    %v2194 = vpack.c.b16 %v2059, %v2056
    %v2195 = vpack.c.b16 %v2060, %v2057
    %v2196 = vpack.c.b16 %v2061, %v2058
    %v2197 = vpack.c.b16 %v2065, %v2062
    %v2198 = vpack.c.b16 %v2066, %v2063
    %v2199 = vpack.c.b16 %v2067, %v2064
    %v2200 = vpack.c.b16 %v2071, %v2068
    %v2201 = vpack.c.b16 %v2072, %v2069
    %v2202 = vpack.c.b16 %v2073, %v2070
    %v2203 = vpack.c.b16 %v2077, %v2074
    %v2204 = vpack.c.b16 %v2078, %v2075
    %v2205 = vpack.c.b16 %v2079, %v2076
    %v2206 = vpack.c.b16 %v2083, %v2080
    %v2207 = vpack.c.b16 %v2084, %v2081
    %v2208 = vpack.c.b16 %v2085, %v2082
    %v2209 = vpack.c.b16 %v2089, %v2086
    %v2210 = vpack.c.b16 %v2090, %v2087
    %v2211 = vpack.c.b16 %v2091, %v2088
    %v2212 = vpack.c.b16 %v2095, %v2092
    %v2213 = vpack.c.b16 %v2096, %v2093
    %v2214 = vpack.c.b16 %v2097, %v2094
    %v2215 = vpack.c.b16 %v2101, %v2098
    %v2216 = vpack.c.b16 %v2102, %v2099
    %v2217 = vpack.c.b16 %v2103, %v2100
    %v2218 = vpack.c.b16 %v2107, %v2104
    %v2219 = vpack.c.b16 %v2108, %v2105
    %v2220 = vpack.c.b16 %v2109, %v2106
    %v2221 = vpack.c.b16 %v2113, %v2110
    %v2222 = vpack.c.b16 %v2114, %v2111
    %v2223 = vpack.c.b16 %v2115, %v2112
    %v2224 = vpack.c.b16 %v2119, %v2116
    %v2225 = vpack.c.b16 %v2120, %v2117
    %v2226 = vpack.c.b16 %v2121, %v2118
    %v2227 = vpack.c.b16 %v2125, %v2122
    %v2228 = vpack.c.b16 %v2126, %v2123
    %v2229 = vpack.c.b16 %v2127, %v2124
    %v2230 = vpack.c.b16 %v2131, %v2128
    %v2231 = vpack.c.b16 %v2132, %v2129
    %v2232 = vpack.c.b16 %v2133, %v2130
    %v2233 = vpack.c.b16 %v2137, %v2134
    %v2234 = vpack.c.b16 %v2138, %v2135
    %v2235 = vpack.c.b16 %v2139, %v2136
    %2332 = vmatprep.subr.bf16.mxu0 %v2162
    %2333 = vmatpush1.bf16.msra.mxu0 %v2161
    %2334 = vmatprep.subr.bf16.mxu0 %v2159
    %2335 = vmatpush1.bf16.msra.mxu0 %v2158
    %2336 = vmatprep.subr.bf16.mxu0 %v2156
    %2337 = vmatpush1.bf16.msra.mxu0 %v2155
    %2338 = vmatprep.subr.bf16.mxu0 %v2153
    %2339 = vmatpush1.bf16.msra.mxu0 %v2152
    %2340 = vmatprep.subr.bf16.mxu0 %v2150
    %2341 = vmatpush1.bf16.msra.mxu0 %v2149
    %2342 = vmatprep.subr.bf16.mxu0 %v2147
    %2343 = vmatpush1.bf16.msra.mxu0 %v2146
    %2344 = vmatprep.subr.bf16.mxu0 %v2144
    %2345 = vmatpush1.bf16.msra.mxu0 %v2143
    %2346 = vmatprep.subr.bf16.mxu0 %v2141
    %2347 = vmatpush1.bf16.msra.mxu0 %v2140
    %2348 = vmatprep.subr.bf16.mxu0 %v2186
    %2349 = vmatpush2.bf16.msra.mxu0 %v2185
    %2350 = vmatprep.subr.bf16.mxu0 %v2183
    %2351 = vmatpush2.bf16.msra.mxu0 %v2182
    %2352 = vmatprep.subr.bf16.mxu0 %v2180
    %2353 = vmatpush2.bf16.msra.mxu0 %v2179
    %2354 = vmatprep.subr.bf16.mxu0 %v2177
    %2355 = vmatpush2.bf16.msra.mxu0 %v2176
    %2356 = vmatprep.subr.bf16.mxu0 %v2174
    %2357 = vmatpush2.bf16.msra.mxu0 %v2173
    %2358 = vmatprep.subr.bf16.mxu0 %v2171
    %2359 = vmatpush2.bf16.msra.mxu0 %v2170
    %2360 = vmatprep.subr.bf16.mxu0 %v2168
    %2361 = vmatpush2.bf16.msra.mxu0 %v2167
    %2362 = vmatprep.subr.bf16.mxu0 %v2165
    %2363 = vmatpush2.bf16.msra.mxu0 %v2164
    %2364 = vmatprep.mubr.bf16.mxu0 %v1672
    %2365 = vmatmul.mubr.bf16.gmra.mxu0 %v1671
    %v2366 = vpop.f32.mrf.mxu0
    %v2367 = vadd.f32 %v1808, %v2366
    %v2368 = vpop.f32.mrf.mxu0
    %v2369 = vadd.f32 %v1812, %v2368
    %v2370 = vpop.f32.mrf.mxu0
    %v2371 = vadd.f32 %v1808, %v2370
    %v2372 = vpop.f32.mrf.mxu0
    %v2373 = vadd.f32 %v1812, %v2372
    %2374 = vdwg.mxu0
    %2375 = vmatprep.subr.bf16.mxu0 %v2210
    %2376 = vmatpush1.bf16.msra.mxu0 %v2209
    %2377 = vmatprep.subr.bf16.mxu0 %v2207
    %2378 = vmatpush1.bf16.msra.mxu0 %v2206
    %2379 = vmatprep.subr.bf16.mxu0 %v2204
    %2380 = vmatpush1.bf16.msra.mxu0 %v2203
    %2381 = vmatprep.subr.bf16.mxu0 %v2201
    %2382 = vmatpush1.bf16.msra.mxu0 %v2200
    %2383 = vmatprep.subr.bf16.mxu0 %v2198
    %2384 = vmatpush1.bf16.msra.mxu0 %v2197
    %2385 = vmatprep.subr.bf16.mxu0 %v2195
    %2386 = vmatpush1.bf16.msra.mxu0 %v2194
    %2387 = vmatprep.subr.bf16.mxu0 %v2192
    %2388 = vmatpush1.bf16.msra.mxu0 %v2191
    %2389 = vmatprep.subr.bf16.mxu0 %v2189
    %2390 = vmatpush1.bf16.msra.mxu0 %v2188
    %2391 = vmatprep.subr.bf16.mxu0 %v2234
    %2392 = vmatpush2.bf16.msra.mxu0 %v2233
    %2393 = vmatprep.subr.bf16.mxu0 %v2231
    %2394 = vmatpush2.bf16.msra.mxu0 %v2230
    %2395 = vmatprep.subr.bf16.mxu0 %v2228
    %2396 = vmatpush2.bf16.msra.mxu0 %v2227
    %2397 = vmatprep.subr.bf16.mxu0 %v2225
    %2398 = vmatpush2.bf16.msra.mxu0 %v2224
    %2399 = vmatprep.subr.bf16.mxu0 %v2222
    %2400 = vmatpush2.bf16.msra.mxu0 %v2221
    %2401 = vmatprep.subr.bf16.mxu0 %v2219
    %2402 = vmatpush2.bf16.msra.mxu0 %v2218
    %2403 = vmatprep.subr.bf16.mxu0 %v2216
    %2404 = vmatpush2.bf16.msra.mxu0 %v2215
    %2405 = vmatprep.subr.bf16.mxu0 %v2213
    %2406 = vmatpush2.bf16.msra.mxu0 %v2212
    %2407 = vmatprep.mubr.bf16.mxu0 %v1674
    %2408 = vmatmul.mubr.bf16.gmra.mxu0 %v1673
    %v2409 = vpop.f32.mrf.mxu0
    %v2410 = vadd.f32 %v2367, %v2409
    %v2411 = vpop.f32.mrf.mxu0
    %v2412 = vadd.f32 %v2369, %v2411
    %v2413 = vpop.f32.mrf.mxu0
    %v2414 = vadd.f32 %v2371, %v2413
    %v2415 = vpop.f32.mrf.mxu0
    %v2416 = vadd.f32 %v2373, %v2415
    %2417 = vdwg.mxu0
    %2418 = vmatprep.subr.bf16.mxu0 0
    %2419 = vmatpush1.bf16.msra.mxu0 %v2163
    %2420 = vmatprep.subr.bf16.mxu0 0
    %2421 = vmatpush1.bf16.msra.mxu0 %v2160
    %2422 = vmatprep.subr.bf16.mxu0 0
    %2423 = vmatpush1.bf16.msra.mxu0 %v2157
    %2424 = vmatprep.subr.bf16.mxu0 0
    %2425 = vmatpush1.bf16.msra.mxu0 %v2154
    %2426 = vmatprep.subr.bf16.mxu0 0
    %2427 = vmatpush1.bf16.msra.mxu0 %v2151
    %2428 = vmatprep.subr.bf16.mxu0 0
    %2429 = vmatpush1.bf16.msra.mxu0 %v2148
    %2430 = vmatprep.subr.bf16.mxu0 0
    %2431 = vmatpush1.bf16.msra.mxu0 %v2145
    %2432 = vmatprep.subr.bf16.mxu0 0
    %2433 = vmatpush1.bf16.msra.mxu0 %v2142
    %2434 = vmatprep.subr.bf16.mxu0 0
    %2435 = vmatpush2.bf16.msra.mxu0 %v2187
    %2436 = vmatprep.subr.bf16.mxu0 0
    %2437 = vmatpush2.bf16.msra.mxu0 %v2184
    %2438 = vmatprep.subr.bf16.mxu0 0
    %2439 = vmatpush2.bf16.msra.mxu0 %v2181
    %2440 = vmatprep.subr.bf16.mxu0 0
    %2441 = vmatpush2.bf16.msra.mxu0 %v2178
    %2442 = vmatprep.subr.bf16.mxu0 0
    %2443 = vmatpush2.bf16.msra.mxu0 %v2175
    %2444 = vmatprep.subr.bf16.mxu0 0
    %2445 = vmatpush2.bf16.msra.mxu0 %v2172
    %2446 = vmatprep.subr.bf16.mxu0 0
    %2447 = vmatpush2.bf16.msra.mxu0 %v2169
    %2448 = vmatprep.subr.bf16.mxu0 0
    %2449 = vmatpush2.bf16.msra.mxu0 %v2166
    %2450 = vmatprep.mubr.bf16.mxu0 %v1672
    %2451 = vmatmul.mubr.bf16.gmra.mxu0 %v1671
    %v2452 = vpop.f32.mrf.mxu0
    %v2453 = vadd.f32 %v1816, %v2452
    %v2454 = vpop.f32.mrf.mxu0
    %v2455 = vpop.f32.mrf.mxu0
    %v2456 = vadd.f32 %v1816, %v2455
    %v2457 = vpop.f32.mrf.mxu0
    %2458 = vdwg.mxu0
    %2459 = vmatprep.subr.bf16.mxu0 0
    %2460 = vmatpush1.bf16.msra.mxu0 %v2211
    %2461 = vmatprep.subr.bf16.mxu0 0
    %2462 = vmatpush1.bf16.msra.mxu0 %v2208
    %2463 = vmatprep.subr.bf16.mxu0 0
    %2464 = vmatpush1.bf16.msra.mxu0 %v2205
    %2465 = vmatprep.subr.bf16.mxu0 0
    %2466 = vmatpush1.bf16.msra.mxu0 %v2202
    %2467 = vmatprep.subr.bf16.mxu0 0
    %2468 = vmatpush1.bf16.msra.mxu0 %v2199
    %2469 = vmatprep.subr.bf16.mxu0 0
    %2470 = vmatpush1.bf16.msra.mxu0 %v2196
    %2471 = vmatprep.subr.bf16.mxu0 0
    %2472 = vmatpush1.bf16.msra.mxu0 %v2193
    %2473 = vmatprep.subr.bf16.mxu0 0
    %2474 = vmatpush1.bf16.msra.mxu0 %v2190
    %2475 = vmatprep.subr.bf16.mxu0 0
    %2476 = vmatpush2.bf16.msra.mxu0 %v2235
    %2477 = vmatprep.subr.bf16.mxu0 0
    %2478 = vmatpush2.bf16.msra.mxu0 %v2232
    %2479 = vmatprep.subr.bf16.mxu0 0
    %2480 = vmatpush2.bf16.msra.mxu0 %v2229
    %2481 = vmatprep.subr.bf16.mxu0 0
    %2482 = vmatpush2.bf16.msra.mxu0 %v2226
    %2483 = vmatprep.subr.bf16.mxu0 0
    %2484 = vmatpush2.bf16.msra.mxu0 %v2223
    %2485 = vmatprep.subr.bf16.mxu0 0
    %2486 = vmatpush2.bf16.msra.mxu0 %v2220
    %2487 = vmatprep.subr.bf16.mxu0 0
    %2488 = vmatpush2.bf16.msra.mxu0 %v2217
    %2489 = vmatprep.subr.bf16.mxu0 0
    %2490 = vmatpush2.bf16.msra.mxu0 %v2214
    %2491 = vmatprep.mubr.bf16.mxu0 %v1674
    %2492 = vmatmul.mubr.bf16.gmra.mxu0 %v1673
    %v2493 = vpop.f32.mrf.mxu0
    %v2494 = vadd.f32 %v2453, %v2493
    %v2495 = vpop.f32.mrf.mxu0
    %v2496 = vpop.f32.mrf.mxu0
    %v2497 = vadd.f32 %v2456, %v2496
    %v2498 = vpop.f32.mrf.mxu0
    %2499 = vdwg.mxu0
    %v2500 = vmax.f32 %v2410, 0.0
    %v2501 = vmax.f32 %v2412, 0.0
    %v2502 = vmax.f32 %v2494, 0.0
    %v2503 = vmax.f32 %v2414, 0.0
    %v2504 = vmax.f32 %v2416, 0.0
    %v2505 = vmax.f32 %v2497, 0.0
    %v2506 = vpack.c.bf16 %v2503, %v2500
    %v2507 = vpack.c.bf16 %v2504, %v2501
    %v2508 = vpack.c.bf16 %v2505, %v2502
    %v2509 = vld [vmem:[#allocation6] sm:$0xf]
    %v2510 = vld [vmem:[#allocation6 + $0x4] sm:$0xf]
    %v2511 = vld [vmem:[#allocation6 + $0x8] sm:$0xf]
    %v2512 = vld [vmem:[#allocation6 + $0xc] sm:$0xf]
    %v2513 = vld [vmem:[#allocation6 + $0x10] sm:$0xf]
    %v2514 = vld [vmem:[#allocation6 + $0x14] sm:$0xf]
    %v2515 = vld [vmem:[#allocation6 + $0x18] sm:$0xf]
    %v2516 = vld [vmem:[#allocation6 + $0x1c] sm:$0xf]
    %v2517 = vld [vmem:[#allocation6 + $0x20] sm:$0xf]
    %v2518 = vld [vmem:[#allocation6 + $0x24] sm:$0xf]
    %v2519 = vld [vmem:[#allocation6 + $0x28] sm:$0xf]
    %v2520 = vld [vmem:[#allocation6 + $0x2c] sm:$0xf]
    %v2521 = vld [vmem:[#allocation6 + $0x30] sm:$0xf]
    %v2522 = vld [vmem:[#allocation6 + $0x34] sm:$0xf]
    %v2523 = vld [vmem:[#allocation6 + $0x38] sm:$0xf]
    %v2524 = vld [vmem:[#allocation6 + $0x3c] sm:$0xf]
    %v2525 = vld [vmem:[#allocation6 + $0x40] sm:$0xf]
    %v2526 = vld [vmem:[#allocation6 + $0x44] sm:$0xf]
    %v2527 = vld [vmem:[#allocation6 + $0x48] sm:$0xf]
    %v2528 = vld [vmem:[#allocation6 + $0x4c] sm:$0xf]
    %v2529 = vld [vmem:[#allocation6 + $0x50] sm:$0xf]
    %v2530 = vld [vmem:[#allocation6 + $0x54] sm:$0xf]
    %v2531 = vld [vmem:[#allocation6 + $0x58] sm:$0xf]
    %v2532 = vld [vmem:[#allocation6 + $0x5c] sm:$0xf]
    %v2533 = vld [vmem:[#allocation6 + $0x60] sm:$0xf]
    %v2534 = vld [vmem:[#allocation6 + $0x64] sm:$0xf]
    %v2535 = vld [vmem:[#allocation6 + $0x68] sm:$0xf]
    %v2536 = vld [vmem:[#allocation6 + $0x6c] sm:$0xf]
    %v2537 = vld [vmem:[#allocation6 + $0x70] sm:$0xf]
    %v2538 = vld [vmem:[#allocation6 + $0x74] sm:$0xf]
    %v2539 = vld [vmem:[#allocation6 + $0x78] sm:$0xf]
    %v2540 = vld [vmem:[#allocation6 + $0x7c] sm:$0xf]
    %v2541 = vld [vmem:[#allocation6 + $0x80] sm:$0xf]
    %v2542 = vld [vmem:[#allocation6 + $0x84] sm:$0xf]
    %v2543 = vld [vmem:[#allocation6 + $0x88] sm:$0xf]
    %v2544 = vld [vmem:[#allocation6 + $0x8c] sm:$0xf]
    %v2545 = vld [vmem:[#allocation6 + $0x90] sm:$0xf]
    %v2546 = vld [vmem:[#allocation6 + $0x94] sm:$0xf]
    %v2547 = vld [vmem:[#allocation6 + $0x98] sm:$0xf]
    %v2548 = vld [vmem:[#allocation6 + $0x9c] sm:$0xf]
    %v2549 = vld [vmem:[#allocation6 + $0xa0] sm:$0xf]
    %v2550 = vld [vmem:[#allocation6 + $0xa4] sm:$0xf]
    %v2551 = vld [vmem:[#allocation6 + $0xa8] sm:$0xf]
    %v2552 = vld [vmem:[#allocation6 + $0xac] sm:$0xf]
    %v2553 = vld [vmem:[#allocation6 + $0xb0] sm:$0xf]
    %v2554 = vld [vmem:[#allocation6 + $0xb4] sm:$0xf]
    %v2555 = vld [vmem:[#allocation6 + $0xb8] sm:$0xf]
    %v2556 = vld [vmem:[#allocation6 + $0xbc] sm:$0xf]
    %v2557 = vld [vmem:[%s6] sm:$0x1]
    %v2559 = vlaneseq
    %v2560 = vshrl.u32 %v2559, 7
    %v2561 = vsub.s32 0, %v2560
    %v2562 = vrot.slane %v2557, %v2561
    %v2612 = vunpack.c.l.b16 %v2509
    %v2613 = vunpack.c.l.b16 %v2510
    %v2614 = vunpack.c.l.b16 %v2511
    %v2615 = vunpack.c.l.b16 %v2512
    %v2616 = vunpack.c.l.b16 %v2513
    %v2617 = vunpack.c.l.b16 %v2514
    %v2618 = vunpack.c.l.b16 %v2515
    %v2619 = vunpack.c.l.b16 %v2516
    %v2620 = vunpack.c.l.b16 %v2517
    %v2621 = vunpack.c.l.b16 %v2518
    %v2622 = vunpack.c.l.b16 %v2519
    %v2623 = vunpack.c.l.b16 %v2520
    %v2624 = vunpack.c.l.b16 %v2521
    %v2625 = vunpack.c.l.b16 %v2522
    %v2626 = vunpack.c.l.b16 %v2523
    %v2627 = vunpack.c.l.b16 %v2524
    %v2628 = vunpack.c.l.b16 %v2525
    %v2629 = vunpack.c.l.b16 %v2526
    %v2630 = vunpack.c.l.b16 %v2527
    %v2631 = vunpack.c.l.b16 %v2528
    %v2632 = vunpack.c.l.b16 %v2529
    %v2633 = vunpack.c.l.b16 %v2530
    %v2634 = vunpack.c.l.b16 %v2531
    %v2635 = vunpack.c.l.b16 %v2532
    %v2636 = vunpack.c.l.b16 %v2533
    %v2637 = vunpack.c.l.b16 %v2534
    %v2638 = vunpack.c.l.b16 %v2535
    %v2639 = vunpack.c.l.b16 %v2536
    %v2640 = vunpack.c.l.b16 %v2537
    %v2641 = vunpack.c.l.b16 %v2538
    %v2642 = vunpack.c.l.b16 %v2539
    %v2643 = vunpack.c.l.b16 %v2540
    %v2644 = vunpack.c.l.b16 %v2541
    %v2645 = vunpack.c.l.b16 %v2542
    %v2646 = vunpack.c.l.b16 %v2543
    %v2647 = vunpack.c.l.b16 %v2544
    %v2648 = vunpack.c.l.b16 %v2545
    %v2649 = vunpack.c.l.b16 %v2546
    %v2650 = vunpack.c.l.b16 %v2547
    %v2651 = vunpack.c.l.b16 %v2548
    %v2652 = vunpack.c.l.b16 %v2549
    %v2653 = vunpack.c.l.b16 %v2550
    %v2654 = vunpack.c.l.b16 %v2551
    %v2655 = vunpack.c.l.b16 %v2552
    %v2656 = vunpack.c.l.b16 %v2553
    %v2657 = vunpack.c.l.b16 %v2554
    %v2658 = vunpack.c.l.b16 %v2555
    %v2659 = vunpack.c.l.b16 %v2556
    %v2660 = vpack.c.b16 %v2613, %v2612
    %v2661 = vpack.c.b16 %v2615, %v2614
    %v2662 = vpack.c.b16 %v2617, %v2616
    %v2663 = vpack.c.b16 %v2619, %v2618
    %v2664 = vpack.c.b16 %v2621, %v2620
    %v2665 = vpack.c.b16 %v2623, %v2622
    %v2666 = vpack.c.b16 %v2625, %v2624
    %v2667 = vpack.c.b16 %v2627, %v2626
    %v2668 = vpack.c.b16 %v2629, %v2628
    %v2669 = vpack.c.b16 %v2631, %v2630
    %v2670 = vpack.c.b16 %v2633, %v2632
    %v2671 = vpack.c.b16 %v2635, %v2634
    %v2672 = vpack.c.b16 %v2637, %v2636
    %v2673 = vpack.c.b16 %v2639, %v2638
    %v2674 = vpack.c.b16 %v2641, %v2640
    %v2675 = vpack.c.b16 %v2643, %v2642
    %v2676 = vpack.c.b16 %v2645, %v2644
    %v2677 = vpack.c.b16 %v2647, %v2646
    %v2678 = vpack.c.b16 %v2649, %v2648
    %v2679 = vpack.c.b16 %v2651, %v2650
    %v2680 = vpack.c.b16 %v2653, %v2652
    %v2681 = vpack.c.b16 %v2655, %v2654
    %v2682 = vpack.c.b16 %v2657, %v2656
    %v2683 = vpack.c.b16 %v2659, %v2658
    %2708 = vmatprep.subr.bf16.mxu0 0
    %2709 = vmatpush1.bf16.msra.mxu0 %v2667
    %2710 = vmatprep.subr.bf16.mxu0 0
    %2711 = vmatpush1.bf16.msra.mxu0 %v2666
    %2712 = vmatprep.subr.bf16.mxu0 0
    %2713 = vmatpush1.bf16.msra.mxu0 %v2665
    %2714 = vmatprep.subr.bf16.mxu0 0
    %2715 = vmatpush1.bf16.msra.mxu0 %v2664
    %2716 = vmatprep.subr.bf16.mxu0 0
    %2717 = vmatpush1.bf16.msra.mxu0 %v2663
    %2718 = vmatprep.subr.bf16.mxu0 0
    %2719 = vmatpush1.bf16.msra.mxu0 %v2662
    %2720 = vmatprep.subr.bf16.mxu0 0
    %2721 = vmatpush1.bf16.msra.mxu0 %v2661
    %2722 = vmatprep.subr.bf16.mxu0 0
    %2723 = vmatpush1.bf16.msra.mxu0 %v2660
    %2724 = vmatprep.subr.bf16.mxu0 0
    %2725 = vmatpush2.bf16.msra.mxu0 %v2675
    %2726 = vmatprep.subr.bf16.mxu0 0
    %2727 = vmatpush2.bf16.msra.mxu0 %v2674
    %2728 = vmatprep.subr.bf16.mxu0 0
    %2729 = vmatpush2.bf16.msra.mxu0 %v2673
    %2730 = vmatprep.subr.bf16.mxu0 0
    %2731 = vmatpush2.bf16.msra.mxu0 %v2672
    %2732 = vmatprep.subr.bf16.mxu0 0
    %2733 = vmatpush2.bf16.msra.mxu0 %v2671
    %2734 = vmatprep.subr.bf16.mxu0 0
    %2735 = vmatpush2.bf16.msra.mxu0 %v2670
    %2736 = vmatprep.subr.bf16.mxu0 0
    %2737 = vmatpush2.bf16.msra.mxu0 %v2669
    %2738 = vmatprep.subr.bf16.mxu0 0
    %2739 = vmatpush2.bf16.msra.mxu0 %v2668
    %2740 = vmatprep.mubr.bf16.mxu0 %v2507
    %2741 = vmatmul.mubr.bf16.gmra.mxu0 %v2506
    %v2742 = vpop.f32.mrf.mxu0
    %v2743 = vadd.f32 %v2562, %v2742
    %v2744 = vpop.f32.mrf.mxu0
    %v2745 = vpop.f32.mrf.mxu0
    %v2746 = vadd.f32 %v2562, %v2745
    %v2747 = vpop.f32.mrf.mxu0
    %2748 = vdwg.mxu0
    %2749 = vmatprep.subr.bf16.mxu0 0
    %2750 = vmatpush1.bf16.msra.mxu0 %v2683
    %2751 = vmatprep.subr.bf16.mxu0 0
    %2752 = vmatpush1.bf16.msra.mxu0 %v2682
    %2753 = vmatprep.subr.bf16.mxu0 0
    %2754 = vmatpush1.bf16.msra.mxu0 %v2681
    %2755 = vmatprep.subr.bf16.mxu0 0
    %2756 = vmatpush1.bf16.msra.mxu0 %v2680
    %2757 = vmatprep.subr.bf16.mxu0 0
    %2758 = vmatpush1.bf16.msra.mxu0 %v2679
    %2759 = vmatprep.subr.bf16.mxu0 0
    %2760 = vmatpush1.bf16.msra.mxu0 %v2678
    %2761 = vmatprep.subr.bf16.mxu0 0
    %2762 = vmatpush1.bf16.msra.mxu0 %v2677
    %2763 = vmatprep.subr.bf16.mxu0 0
    %2764 = vmatpush1.bf16.msra.mxu0 %v2676
    %2765 = vmatprep.subr.bf16.mxu0 0
    %2766 = vmatpush2.bf16.msra.mxu0 0
    %2767 = vmatprep.subr.bf16.mxu0 0
    %2768 = vmatpush2.bf16.msra.mxu0 0
    %2769 = vmatprep.subr.bf16.mxu0 0
    %2770 = vmatpush2.bf16.msra.mxu0 0
    %2771 = vmatprep.subr.bf16.mxu0 0
    %2772 = vmatpush2.bf16.msra.mxu0 0
    %2773 = vmatprep.subr.bf16.mxu0 0
    %2774 = vmatpush2.bf16.msra.mxu0 0
    %2775 = vmatprep.subr.bf16.mxu0 0
    %2776 = vmatpush2.bf16.msra.mxu0 0
    %2777 = vmatprep.subr.bf16.mxu0 0
    %2778 = vmatpush2.bf16.msra.mxu0 0
    %2779 = vmatprep.subr.bf16.mxu0 0
    %2780 = vmatpush2.bf16.msra.mxu0 0
    %2781 = vmatprep.mubr.bf16.mxu0 0
    %2782 = vmatmul.mubr.bf16.gmra.mxu0 %v2508
    %v2783 = vpop.f32.mrf.mxu0
    %v2784 = vadd.f32 %v2743, %v2783
    %v2785 = vpop.f32.mrf.mxu0
    %v2786 = vpop.f32.mrf.mxu0
    %v2787 = vadd.f32 %v2746, %v2786
    %v2788 = vpop.f32.mrf.mxu0
    %2789 = vdwg.mxu0
    %v2790 = vmax.f32 %v2784, 0.0
    %v2791 = vmax.f32 %v2787, 0.0
    %v2792 = vpack.c.bf16 %v2791, %v2790
    %v2793 = vld [vmem:[%s7] sm:$0xf]
    %v2794 = vld [vmem:[%s7 + $0x4] sm:$0xf]
    %v2795 = vld [vmem:[%s7 + $0x8] sm:$0xf]
    %v2796 = vld [vmem:[%s7 + $0xc] sm:$0xf]
    %v2797 = vld [vmem:[%s7 + $0x10] sm:$0xf]
    %v2798 = vld [vmem:[%s7 + $0x14] sm:$0xf]
    %v2799 = vld [vmem:[%s7 + $0x18] sm:$0xf]
    %v2800 = vld [vmem:[%s7 + $0x1c] sm:$0xf]
    %v2801 = vld [vmem:[%s7 + $0x20] sm:$0xf]
    %v2802 = vld [vmem:[%s7 + $0x24] sm:$0xf]
    %v2803 = vld [vmem:[%s7 + $0x28] sm:$0xf]
    %v2804 = vld [vmem:[%s7 + $0x2c] sm:$0xf]
    %v2805 = vld [vmem:[%s7 + $0x30] sm:$0xf]
    %v2806 = vld [vmem:[%s7 + $0x34] sm:$0xf]
    %v2807 = vld [vmem:[%s7 + $0x38] sm:$0xf]
    %v2808 = vld [vmem:[%s7 + $0x3c] sm:$0xf]
    %v2809 = vld [vmem:[%s8] sm:$0x1]
    %v2811 = vlaneseq
    %v2812 = vshrl.u32 %v2811, 7
    %v2813 = vsub.s32 0, %v2812
    %v2814 = vrot.slane %v2809, %v2813
    %v2832 = vunpack.c.l.b16 %v2793
    %v2833 = vunpack.c.l.b16 %v2794
    %v2834 = vunpack.c.l.b16 %v2795
    %v2835 = vunpack.c.l.b16 %v2796
    %v2836 = vunpack.c.l.b16 %v2797
    %v2837 = vunpack.c.l.b16 %v2798
    %v2838 = vunpack.c.l.b16 %v2799
    %v2839 = vunpack.c.l.b16 %v2800
    %v2840 = vunpack.c.l.b16 %v2801
    %v2841 = vunpack.c.l.b16 %v2802
    %v2842 = vunpack.c.l.b16 %v2803
    %v2843 = vunpack.c.l.b16 %v2804
    %v2844 = vunpack.c.l.b16 %v2805
    %v2845 = vunpack.c.l.b16 %v2806
    %v2846 = vunpack.c.l.b16 %v2807
    %v2847 = vunpack.c.l.b16 %v2808
    %v2848 = vpack.c.b16 %v2833, %v2832
    %v2849 = vpack.c.b16 %v2835, %v2834
    %v2850 = vpack.c.b16 %v2837, %v2836
    %v2851 = vpack.c.b16 %v2839, %v2838
    %v2852 = vpack.c.b16 %v2841, %v2840
    %v2853 = vpack.c.b16 %v2843, %v2842
    %v2854 = vpack.c.b16 %v2845, %v2844
    %v2855 = vpack.c.b16 %v2847, %v2846
    %2864 = vmatprep.subr.bf16.mxu0 0
    %2865 = vmatpush1.bf16.msra.mxu0 %v2855
    %2866 = vmatprep.subr.bf16.mxu0 0
    %2867 = vmatpush1.bf16.msra.mxu0 %v2854
    %2868 = vmatprep.subr.bf16.mxu0 0
    %2869 = vmatpush1.bf16.msra.mxu0 %v2853
    %2870 = vmatprep.subr.bf16.mxu0 0
    %2871 = vmatpush1.bf16.msra.mxu0 %v2852
    %2872 = vmatprep.subr.bf16.mxu0 0
    %2873 = vmatpush1.bf16.msra.mxu0 %v2851
    %2874 = vmatprep.subr.bf16.mxu0 0
    %2875 = vmatpush1.bf16.msra.mxu0 %v2850
    %2876 = vmatprep.subr.bf16.mxu0 0
    %2877 = vmatpush1.bf16.msra.mxu0 %v2849
    %2878 = vmatprep.subr.bf16.mxu0 0
    %2879 = vmatpush1.bf16.msra.mxu0 %v2848
    %2880 = vmatprep.subr.bf16.mxu0 0
    %2881 = vmatpush2.bf16.msra.mxu0 0
    %2882 = vmatprep.subr.bf16.mxu0 0
    %2883 = vmatpush2.bf16.msra.mxu0 0
    %2884 = vmatprep.subr.bf16.mxu0 0
    %2885 = vmatpush2.bf16.msra.mxu0 0
    %2886 = vmatprep.subr.bf16.mxu0 0
    %2887 = vmatpush2.bf16.msra.mxu0 0
    %2888 = vmatprep.subr.bf16.mxu0 0
    %2889 = vmatpush2.bf16.msra.mxu0 0
    %2890 = vmatprep.subr.bf16.mxu0 0
    %2891 = vmatpush2.bf16.msra.mxu0 0
    %2892 = vmatprep.subr.bf16.mxu0 0
    %2893 = vmatpush2.bf16.msra.mxu0 0
    %2894 = vmatprep.subr.bf16.mxu0 0
    %2895 = vmatpush2.bf16.msra.mxu0 0
    %2896 = vmatprep.mubr.bf16.mxu0 0
    %2897 = vmatmul.mubr.bf16.gmra.mxu0 %v2792
    %v2898 = vpop.f32.mrf.mxu0
    %v2899 = vadd.f32 %v2814, %v2898
    %v2900 = vpop.f32.mrf.mxu0
    %v2901 = vpop.f32.mrf.mxu0
    %v2902 = vadd.f32 %v2814, %v2901
    %v2903 = vpop.f32.mrf.mxu0
    %2904 = vdwg.mxu0
    %2905 = vst [vmem:[%s9] sm:$0xff] %v2899
    %2906 = vst [vmem:[%s9 + $0x8] sm:$0xff] %v2902
    // Predicated region
    $region50: #{neural_network_forward.1} parent=1 // pred_check
      _
    $region51: #{neural_network_forward.1} parent=1 // pred_check_branch
      %2908 = sbr.rel (0) target = $region53
    $region52: #{neural_network_forward.1} parent=1 // pred_region
      _
    $region53: #{neural_network_forward.1} parent=1 // pred_fallthru
      _
    // Predicated region
    $region54: #{neural_network_forward.1} parent=1 // pred_check
      _
    $region55: #{neural_network_forward.1} parent=1 // pred_check_branch
      %2910 = sbr.rel (0) target = $region57
    $region56: #{neural_network_forward.1} parent=1 // pred_region
      _
    $region57: #{neural_network_forward.1} parent=1 // pred_fallthru
      _
    %2911 = vsyncpa [#allocation3], 1
    %2912 = vsyncpa [#allocation5], 1

</llo_original>
